<compile_context>
chip_gen: v5e
topology: v5e:2x2
jax: 0.10.0
libtpu: 0.0.40
codegen_flags: <defaults>
</compile_context>

<pallas_src>
import functools

import jax
import jax.numpy as jnp
from jax import lax
from jax.experimental import pallas as pl
from jax.experimental.pallas import tpu as pltpu


def _round_up(x, m):
    return (x + m - 1) // m * m


# --------------------------------------------------------------------------------------
# Pass 1: depthwise conv + per-image channel statistics (sum, sum of squares).
# --------------------------------------------------------------------------------------
def _dw_stats_kernel(x_ref, wdw_ref, dw_ref, stats_ref, *, KH, KW, stride, dilation):
    # x_ref:     (1, Hp, Wp, C)   fp32 (channel-padded)
    # wdw_ref:   (KH*KW, C)       fp32
    # dw_ref:    (1, Ho, Wo, C)   bf16 output (depthwise result)
    # stats_ref: (1, 2, C)        fp32 output (row 0: sum, row 1: sum of squares)
    _, Ho, Wo, C = dw_ref.shape

    acc = jnp.zeros((1, Ho, Wo, C), jnp.float32)
    for kh in range(KH):
        for kw in range(KW):
            h0 = kh * dilation
            w0 = kw * dilation
            if stride == 1:
                patch = x_ref[:, h0:h0 + Ho, w0:w0 + Wo, :]
            else:
                # TODO(synk): stride>1 path is untested on Mosaic (test exercises stride=1);
                # falls back to loading the contiguous window and strided lax.slice.
                win = x_ref[:, h0:h0 + (Ho - 1) * stride + 1,
                            w0:w0 + (Wo - 1) * stride + 1, :]
                patch = lax.slice(win, (0, 0, 0, 0), win.shape, (1, stride, stride, 1))
            idx = kh * KW + kw
            w_tap = wdw_ref[idx:idx + 1, :]                  # (1, C), broadcast over lanes
            acc = acc + patch.astype(jnp.float32) * w_tap

    dw_ref[...] = acc.astype(dw_ref.dtype)

    a3 = acc[0]                                              # (Ho, Wo, C) fp32
    s = a3.sum(axis=0).sum(axis=0, keepdims=True)            # (1, C)
    sq = (a3 * a3).sum(axis=0).sum(axis=0, keepdims=True)    # (1, C)
    stats_ref[:, 0:1, :] = s.reshape(1, 1, C)
    stats_ref[:, 1:2, :] = sq.reshape(1, 1, C)


# --------------------------------------------------------------------------------------
# Pass 2: (BN-folded) pointwise conv1 + ReLU + pointwise conv2, row-tiled.
# --------------------------------------------------------------------------------------
def _pw_kernel(y_ref, w1_ref, b1_ref, w2_ref, b2_ref, o_ref):
    # y_ref: (TR, Cpad) bf16   w1_ref: (Cpad, Cmid_p) bf16   w2_ref: (Cmid_p, Cout_p) bf16
    # b1_ref: (1, Cmid_p) f32  b2_ref: (1, Cout_p) f32       o_ref: (TR, Cout_p) f32
    y = y_ref[...]
    h1 = jnp.dot(y, w1_ref[...], preferred_element_type=jnp.float32) + b1_ref[...]
    h1 = jnp.maximum(h1, 0.0)
    out = jnp.dot(h1.astype(jnp.bfloat16), w2_ref[...],
                  preferred_element_type=jnp.float32) + b2_ref[...]
    o_ref[...] = out.astype(o_ref.dtype)


@functools.partial(jax.jit, static_argnames=("kernel_size", "stride", "padding", "dilation"))
def block_forward(x_nchw, params, *, kernel_size=3, stride=1, padding=0,
                  dilation=1, eps=1e-5):
    """Pallas implementation of Block.forward. Input/output are NCHW (PyTorch convention)."""
    w_dw, gamma, beta = params["w_dw"], params["gamma"], params["beta"]
    w1, b1, w2, b2 = params["w1"], params["b1"], params["w2"], params["b2"]

    N, Cin, H, W = x_nchw.shape
    KH = KW = kernel_size
    Cmid = w1.shape[0]
    Cout = w2.shape[0]

    Cpad = _round_up(Cin, 128)
    Cmid_p = _round_up(Cmid, 128)
    Cout_p = _round_up(Cout, 128)

    # ---- single wrapper-side relayout: NCHW -> NHWC, spatial pad, lane-pad channels ----
    x = jnp.transpose(x_nchw, (0, 2, 3, 1)).astype(jnp.float32)
    x = jnp.pad(x, ((0, 0), (padding, padding), (padding, padding), (0, Cpad - Cin)))
    Hp, Wp = x.shape[1], x.shape[2]
    Ho = (Hp - dilation * (KH - 1) - 1) // stride + 1
    Wo = (Wp - dilation * (KW - 1) - 1) // stride + 1

    wdw_k = jnp.transpose(w_dw[:, 0, :, :], (1, 2, 0)).reshape(KH * KW, Cin)
    wdw_k = jnp.pad(wdw_k, ((0, 0), (0, Cpad - Cin)))        # (KH*KW, Cpad)

    cparams = pltpu.CompilerParams(dimension_semantics=("parallel",),
                                   vmem_limit_bytes=32 * 1024 * 1024)

    # ---------------------------- pass 1: depthwise + stats ----------------------------
    dw, stats = pl.pallas_call(
        functools.partial(_dw_stats_kernel, KH=KH, KW=KW, stride=stride, dilation=dilation),
        grid=(N,),
        in_specs=[pl.BlockSpec((1, Hp, Wp, Cpad), lambda n: (n, 0, 0, 0)),
                  pl.BlockSpec((KH * KW, Cpad), lambda n: (0, 0))],
        out_specs=(pl.BlockSpec((1, Ho, Wo, Cpad), lambda n: (n, 0, 0, 0)),
                   pl.BlockSpec((1, 2, Cpad), lambda n: (n, 0, 0))),
        out_shape=(jax.ShapeDtypeStruct((N, Ho, Wo, Cpad), jnp.bfloat16),
                   jax.ShapeDtypeStruct((N, 2, Cpad), jnp.float32)),
        compiler_params=cparams,
        cost_estimate=pl.CostEstimate(
            flops=int(2 * N * Ho * Wo * Cpad * KH * KW),
            transcendentals=0,
            bytes_accessed=int(x.size * 4 + N * Ho * Wo * Cpad * 2 + N * 2 * Cpad * 4)),
    )(x, wdw_k)

    # -------- tiny XLA glue: reduce stats, fold BN into the first pointwise conv --------
    count = N * Ho * Wo
    ch_sum = jnp.sum(stats[:, 0, :Cin], axis=0)
    ch_sqs = jnp.sum(stats[:, 1, :Cin], axis=0)
    mean = ch_sum / count
    var = jnp.maximum(ch_sqs / count - mean * mean, 0.0)      # biased variance (training BN)
    scale = gamma * lax.rsqrt(var + eps)                      # (Cin,)
    shift = beta - mean * scale                               # (Cin,)

    w1_mat = w1[:, :, 0, 0].T                                 # (Cin, Cmid)
    w2_mat = w2[:, :, 0, 0].T                                 # (Cmid, Cout)
    w1_fold = scale[:, None] * w1_mat                         # BN scale folded into W1
    b1_fold = b1 + shift @ w1_mat                             # BN shift folded into bias1

    w1_k = jnp.pad(w1_fold, ((0, Cpad - Cin), (0, Cmid_p - Cmid))).astype(jnp.bfloat16)
    b1_k = jnp.pad(b1_fold, (0, Cmid_p - Cmid)).reshape(1, Cmid_p).astype(jnp.float32)
    w2_k = jnp.pad(w2_mat, ((0, Cmid_p - Cmid), (0, Cout_p - Cout))).astype(jnp.bfloat16)
    b2_k = jnp.pad(b2, (0, Cout_p - Cout)).reshape(1, Cout_p).astype(jnp.float32)

    # ------------------------- pass 2: row-tiled fused pointwise -------------------------
    rows = N * Ho * Wo
    y_flat = dw.reshape(rows, Cpad)                           # leading-dim merge (cheap)
    TR = min(256, _round_up(rows, 8))                         # row tile (multiple of 8)
    grid_r = pl.cdiv(rows, TR)

    out_flat = pl.pallas_call(
        _pw_kernel,
        grid=(grid_r,),
        in_specs=[pl.BlockSpec((TR, Cpad), lambda i: (i, 0)),
                  pl.BlockSpec((Cpad, Cmid_p), lambda i: (0, 0)),
                  pl.BlockSpec((1, Cmid_p), lambda i: (0, 0)),
                  pl.BlockSpec((Cmid_p, Cout_p), lambda i: (0, 0)),
                  pl.BlockSpec((1, Cout_p), lambda i: (0, 0))],
        out_specs=pl.BlockSpec((TR, Cout_p), lambda i: (i, 0)),
        out_shape=jax.ShapeDtypeStruct((rows, Cout_p), jnp.float32),
        compiler_params=cparams,
        cost_estimate=pl.CostEstimate(
            flops=int(2 * rows * Cpad * Cmid_p + 2 * rows * Cmid_p * Cout_p),
            transcendentals=0,
            bytes_accessed=int(rows * Cpad * 2 + Cpad * Cmid_p * 2
                               + Cmid_p * Cout_p * 2 + rows * Cout_p * 4)),
    )(y_flat, w1_k, b1_k, w2_k, b2_k)

    out = out_flat[:, :Cout].reshape(N, Ho, Wo, Cout)
    return jnp.transpose(out, (0, 3, 1, 2))                   # back to NCHW


# --------------------------------------------------------------------------------------
# Pure-JAX fp32 reference (mirrors the PyTorch forward) for verification.
# --------------------------------------------------------------------------------------
def block_forward_ref(x, params, *, kernel_size=3, stride=1, padding=0,
                      dilation=1, eps=1e-5):
    Cin = x.shape[1]
    y = lax.conv_general_dilated(
        x.astype(jnp.float32), params["w_dw"],
        window_strides=(stride, stride),
        padding=[(padding, padding), (padding, padding)],
        rhs_dilation=(dilation, dilation),
        feature_group_count=Cin,
        dimension_numbers=("NCHW", "OIHW", "NCHW"))
    mean = jnp.mean(y, axis=(0, 2, 3), keepdims=True)
    var = jnp.mean((y - mean) ** 2, axis=(0, 2, 3), keepdims=True)
    y = (y - mean) * lax.rsqrt(var + eps)
    y = y * params["gamma"].reshape(1, -1, 1, 1) + params["beta"].reshape(1, -1, 1, 1)
    y = jnp.einsum("nchw,oc->nohw", y, params["w1"][:, :, 0, 0]) \
        + params["b1"].reshape(1, -1, 1, 1)
    y = jnp.maximum(y, 0.0)
    y = jnp.einsum("nchw,oc->nohw", y, params["w2"][:, :, 0, 0]) \
        + params["b2"].reshape(1, -1, 1, 1)
    return y


def init_params(key, in_channels, out_channels, kernel_size=3):
    k = jax.random.split(key, 8)
    Cin, Cmid, Cout = in_channels, in_channels * 4, out_channels
    return {
        "w_dw": 0.3 * jax.random.normal(k[0], (Cin, 1, kernel_size, kernel_size), jnp.float32),
        "gamma": 1.0 + 0.1 * jax.random.normal(k[1], (Cin,), jnp.float32),
        "beta": 0.1 * jax.random.normal(k[2], (Cin,), jnp.float32),
        "w1": 0.3 * jax.random.normal(k[3], (Cmid, Cin, 1, 1), jnp.float32),
        "b1": 0.1 * jax.random.normal(k[4], (Cmid,), jnp.float32),
        "w2": 0.3 * jax.random.normal(k[5], (Cout, Cmid, 1, 1), jnp.float32),
        "b2": 0.1 * jax.random.normal(k[6], (Cout,), jnp.float32),
    }


if __name__ == "__main__":
    key = jax.random.PRNGKey(0)
    kx, kp = jax.random.split(key)

    N, Cin, H, W = 2, 4, 16, 16
    Cout = 8
    x = jax.random.normal(kx, (N, Cin, H, W), jnp.float32)
    params = init_params(kp, Cin, Cout, kernel_size=3)

    out = block_forward(x, params, kernel_size=3, stride=1, padding=0, dilation=1)
    out = jax.block_until_ready(out)

    ref = jax.block_until_ready(
        block_forward_ref(x, params, kernel_size=3, stride=1, padding=0, dilation=1))

    assert out.shape == (N, Cout, H - 2, W - 2), out.shape
    # bf16 MXU operands (fp32 accumulate) per perf feedback -> compare against the fp32
    # reference with a bf16-appropriate tolerance.
    assert jnp.allclose(out, ref, rtol=5e-2, atol=5e-2), \
        f"max err {jnp.max(jnp.abs(out - ref))}"

    print("KERNEL_OK")
</pallas_src>

<mosaic_0001>
module attributes {stable_mosaic.version = 11 : i64} {
  func.func @_dw_stats_kernel(%arg0: i32, %arg1: memref<1x16x16x128xf32, #tpu.memory_space<vmem>>, %arg2: memref<9x128xf32, #tpu.memory_space<vmem>>, %arg3: memref<1x14x14x128xbf16, #tpu.memory_space<vmem>>, %arg4: memref<1x2x128xf32, #tpu.memory_space<vmem>>) attributes {dimension_semantics = [#tpu.dimension_semantics<parallel>], iteration_bounds = array<i64: 2>, scalar_prefetch = 0 : i64, scratch_operands = 0 : i64, tpu.core_type = #tpu.core_type<tc>, window_params = [{transform_indices = @transform_0, window_bounds = array<i64: 1, 16, 16, 128>}, {pipeline_mode = #tpu.pipeline_mode<synchronous>, transform_indices = @transform_1, window_bounds = array<i64: 9, 128>}, {transform_indices = @transform_2, window_bounds = array<i64: 1, 14, 14, 128>}, {transform_indices = @transform_3, window_bounds = array<i64: 1, 2, 128>}]} {
    %cst = arith.constant 0.000000e+00 : f32
    %0 = vector.broadcast %cst : f32 to vector<1x14x14x128xf32>
    %c0 = arith.constant 0 : index
    %c0_0 = arith.constant 0 : index
    %c0_1 = arith.constant 0 : index
    %c0_2 = arith.constant 0 : index
    %1 = vector.load %arg1[%c0, %c0_0, %c0_1, %c0_2] : memref<1x16x16x128xf32, #tpu.memory_space<vmem>>, vector<1x14x14x128xf32>
    %c0_3 = arith.constant 0 : index
    %c0_4 = arith.constant 0 : index
    %2 = vector.load %arg2[%c0_3, %c0_4] : memref<9x128xf32, #tpu.memory_space<vmem>>, vector<1x128xf32>
    %3 = vector.shape_cast %2 : vector<1x128xf32> to vector<1x1x1x128xf32>
    %4 = vector.broadcast %3 : vector<1x1x1x128xf32> to vector<1x14x14x128xf32>
    %5 = arith.mulf %1, %4 : vector<1x14x14x128xf32>
    %6 = arith.addf %0, %5 : vector<1x14x14x128xf32>
    %c0_5 = arith.constant 0 : index
    %c0_6 = arith.constant 0 : index
    %c1 = arith.constant 1 : index
    %c0_7 = arith.constant 0 : index
    %7 = vector.load %arg1[%c0_5, %c0_6, %c1, %c0_7] : memref<1x16x16x128xf32, #tpu.memory_space<vmem>>, vector<1x14x14x128xf32>
    %c1_8 = arith.constant 1 : index
    %c0_9 = arith.constant 0 : index
    %8 = vector.load %arg2[%c1_8, %c0_9] : memref<9x128xf32, #tpu.memory_space<vmem>>, vector<1x128xf32>
    %9 = vector.shape_cast %8 : vector<1x128xf32> to vector<1x1x1x128xf32>
    %10 = vector.broadcast %9 : vector<1x1x1x128xf32> to vector<1x14x14x128xf32>
    %11 = arith.mulf %7, %10 : vector<1x14x14x128xf32>
    %12 = arith.addf %6, %11 : vector<1x14x14x128xf32>
    %c0_10 = arith.constant 0 : index
    %c0_11 = arith.constant 0 : index
    %c2 = arith.constant 2 : index
    %c0_12 = arith.constant 0 : index
    %13 = vector.load %arg1[%c0_10, %c0_11, %c2, %c0_12] : memref<1x16x16x128xf32, #tpu.memory_space<vmem>>, vector<1x14x14x128xf32>
    %c2_13 = arith.constant 2 : index
    %c0_14 = arith.constant 0 : index
    %14 = vector.load %arg2[%c2_13, %c0_14] : memref<9x128xf32, #tpu.memory_space<vmem>>, vector<1x128xf32>
    %15 = vector.shape_cast %14 : vector<1x128xf32> to vector<1x1x1x128xf32>
    %16 = vector.broadcast %15 : vector<1x1x1x128xf32> to vector<1x14x14x128xf32>
    %17 = arith.mulf %13, %16 : vector<1x14x14x128xf32>
    %18 = arith.addf %12, %17 : vector<1x14x14x128xf32>
    %c0_15 = arith.constant 0 : index
    %c1_16 = arith.constant 1 : index
    %c0_17 = arith.constant 0 : index
    %c0_18 = arith.constant 0 : index
    %19 = vector.load %arg1[%c0_15, %c1_16, %c0_17, %c0_18] : memref<1x16x16x128xf32, #tpu.memory_space<vmem>>, vector<1x14x14x128xf32>
    %c3 = arith.constant 3 : index
    %c0_19 = arith.constant 0 : index
    %20 = vector.load %arg2[%c3, %c0_19] : memref<9x128xf32, #tpu.memory_space<vmem>>, vector<1x128xf32>
    %21 = vector.shape_cast %20 : vector<1x128xf32> to vector<1x1x1x128xf32>
    %22 = vector.broadcast %21 : vector<1x1x1x128xf32> to vector<1x14x14x128xf32>
    %23 = arith.mulf %19, %22 : vector<1x14x14x128xf32>
    %24 = arith.addf %18, %23 : vector<1x14x14x128xf32>
    %c0_20 = arith.constant 0 : index
    %c1_21 = arith.constant 1 : index
    %c1_22 = arith.constant 1 : index
    %c0_23 = arith.constant 0 : index
    %25 = vector.load %arg1[%c0_20, %c1_21, %c1_22, %c0_23] : memref<1x16x16x128xf32, #tpu.memory_space<vmem>>, vector<1x14x14x128xf32>
    %c4 = arith.constant 4 : index
    %c0_24 = arith.constant 0 : index
    %26 = vector.load %arg2[%c4, %c0_24] : memref<9x128xf32, #tpu.memory_space<vmem>>, vector<1x128xf32>
    %27 = vector.shape_cast %26 : vector<1x128xf32> to vector<1x1x1x128xf32>
    %28 = vector.broadcast %27 : vector<1x1x1x128xf32> to vector<1x14x14x128xf32>
    %29 = arith.mulf %25, %28 : vector<1x14x14x128xf32>
    %30 = arith.addf %24, %29 : vector<1x14x14x128xf32>
    %c0_25 = arith.constant 0 : index
    %c1_26 = arith.constant 1 : index
    %c2_27 = arith.constant 2 : index
    %c0_28 = arith.constant 0 : index
    %31 = vector.load %arg1[%c0_25, %c1_26, %c2_27, %c0_28] : memref<1x16x16x128xf32, #tpu.memory_space<vmem>>, vector<1x14x14x128xf32>
    %c5 = arith.constant 5 : index
    %c0_29 = arith.constant 0 : index
    %32 = vector.load %arg2[%c5, %c0_29] : memref<9x128xf32, #tpu.memory_space<vmem>>, vector<1x128xf32>
    %33 = vector.shape_cast %32 : vector<1x128xf32> to vector<1x1x1x128xf32>
    %34 = vector.broadcast %33 : vector<1x1x1x128xf32> to vector<1x14x14x128xf32>
    %35 = arith.mulf %31, %34 : vector<1x14x14x128xf32>
    %36 = arith.addf %30, %35 : vector<1x14x14x128xf32>
    %c0_30 = arith.constant 0 : index
    %c2_31 = arith.constant 2 : index
    %c0_32 = arith.constant 0 : index
    %c0_33 = arith.constant 0 : index
    %37 = vector.load %arg1[%c0_30, %c2_31, %c0_32, %c0_33] : memref<1x16x16x128xf32, #tpu.memory_space<vmem>>, vector<1x14x14x128xf32>
    %c6 = arith.constant 6 : index
    %c0_34 = arith.constant 0 : index
    %38 = vector.load %arg2[%c6, %c0_34] : memref<9x128xf32, #tpu.memory_space<vmem>>, vector<1x128xf32>
    %39 = vector.shape_cast %38 : vector<1x128xf32> to vector<1x1x1x128xf32>
    %40 = vector.broadcast %39 : vector<1x1x1x128xf32> to vector<1x14x14x128xf32>
    %41 = arith.mulf %37, %40 : vector<1x14x14x128xf32>
    %42 = arith.addf %36, %41 : vector<1x14x14x128xf32>
    %c0_35 = arith.constant 0 : index
    %c2_36 = arith.constant 2 : index
    %c1_37 = arith.constant 1 : index
    %c0_38 = arith.constant 0 : index
    %43 = vector.load %arg1[%c0_35, %c2_36, %c1_37, %c0_38] : memref<1x16x16x128xf32, #tpu.memory_space<vmem>>, vector<1x14x14x128xf32>
    %c7 = arith.constant 7 : index
    %c0_39 = arith.constant 0 : index
    %44 = vector.load %arg2[%c7, %c0_39] : memref<9x128xf32, #tpu.memory_space<vmem>>, vector<1x128xf32>
    %45 = vector.shape_cast %44 : vector<1x128xf32> to vector<1x1x1x128xf32>
    %46 = vector.broadcast %45 : vector<1x1x1x128xf32> to vector<1x14x14x128xf32>
    %47 = arith.mulf %43, %46 : vector<1x14x14x128xf32>
    %48 = arith.addf %42, %47 : vector<1x14x14x128xf32>
    %c0_40 = arith.constant 0 : index
    %c2_41 = arith.constant 2 : index
    %c2_42 = arith.constant 2 : index
    %c0_43 = arith.constant 0 : index
    %49 = vector.load %arg1[%c0_40, %c2_41, %c2_42, %c0_43] : memref<1x16x16x128xf32, #tpu.memory_space<vmem>>, vector<1x14x14x128xf32>
    %c8 = arith.constant 8 : index
    %c0_44 = arith.constant 0 : index
    %50 = vector.load %arg2[%c8, %c0_44] : memref<9x128xf32, #tpu.memory_space<vmem>>, vector<1x128xf32>
    %51 = vector.shape_cast %50 : vector<1x128xf32> to vector<1x1x1x128xf32>
    %52 = vector.broadcast %51 : vector<1x1x1x128xf32> to vector<1x14x14x128xf32>
    %53 = arith.mulf %49, %52 : vector<1x14x14x128xf32>
    %54 = arith.addf %48, %53 : vector<1x14x14x128xf32>
    %55 = arith.truncf %54 : vector<1x14x14x128xf32> to vector<1x14x14x128xbf16>
    %c0_45 = arith.constant 0 : index
    %c0_46 = arith.constant 0 : index
    %c0_47 = arith.constant 0 : index
    %c0_48 = arith.constant 0 : index
    %56 = vector.load %arg3[%c0_45, %c0_46, %c0_47, %c0_48] : memref<1x14x14x128xbf16, #tpu.memory_space<vmem>>, vector<1x14x14x128xbf16>
    tpu.vector_store %arg3[%c0_45, %c0_46, %c0_47, %c0_48], %55 {strides = array<i32>} : memref<1x14x14x128xbf16, #tpu.memory_space<vmem>>, vector<1x14x14x128xbf16>,
    %57 = vector.shape_cast %54 : vector<1x14x14x128xf32> to vector<14x14x128xf32>
    %cst_49 = arith.constant dense<0.000000e+00> : vector<14x128xf32>
    %58 = vector.multi_reduction <add>, %57, %cst_49 [0] : vector<14x14x128xf32> to vector<14x128xf32>
    %cst_50 = arith.constant dense<0.000000e+00> : vector<128xf32>
    %59 = vector.multi_reduction <add>, %58, %cst_50 [0] : vector<14x128xf32> to vector<128xf32>
    %60 = vector.shape_cast %59 : vector<128xf32> to vector<1x128xf32>
    %61 = arith.mulf %57, %57 : vector<14x14x128xf32>
    %cst_51 = arith.constant dense<0.000000e+00> : vector<14x128xf32>
    %62 = vector.multi_reduction <add>, %61, %cst_51 [0] : vector<14x14x128xf32> to vector<14x128xf32>
    %cst_52 = arith.constant dense<0.000000e+00> : vector<128xf32>
    %63 = vector.multi_reduction <add>, %62, %cst_52 [0] : vector<14x128xf32> to vector<128xf32>
    %64 = vector.shape_cast %63 : vector<128xf32> to vector<1x128xf32>
    %65 = vector.shape_cast %60 : vector<1x128xf32> to vector<1x1x128xf32>
    %c0_53 = arith.constant 0 : index
    %c0_54 = arith.constant 0 : index
    %c0_55 = arith.constant 0 : index
    %66 = vector.load %arg4[%c0_53, %c0_54, %c0_55] : memref<1x2x128xf32, #tpu.memory_space<vmem>>, vector<1x1x128xf32>
    tpu.vector_store %arg4[%c0_53, %c0_54, %c0_55], %65 {strides = array<i32>} : memref<1x2x128xf32, #tpu.memory_space<vmem>>, vector<1x1x128xf32>,
    %67 = vector.shape_cast %64 : vector<1x128xf32> to vector<1x1x128xf32>
    %c0_56 = arith.constant 0 : index
    %c1_57 = arith.constant 1 : index
    %c0_58 = arith.constant 0 : index
    %68 = vector.load %arg4[%c0_56, %c1_57, %c0_58] : memref<1x2x128xf32, #tpu.memory_space<vmem>>, vector<1x1x128xf32>
    tpu.vector_store %arg4[%c0_56, %c1_57, %c0_58], %67 {strides = array<i32>} : memref<1x2x128xf32, #tpu.memory_space<vmem>>, vector<1x1x128xf32>,
    return
  }
  func.func @transform_0(%arg0: i32) -> (i32, i32, i32, i32) {
    %c0_i32 = arith.constant 0 : i32
    %c0_i32_0 = arith.constant 0 : i32
    %c0_i32_1 = arith.constant 0 : i32
    %c0_i32_2 = arith.constant 0 : i32
    return %arg0, %c0_i32, %c0_i32_0, %c0_i32_1 : i32, i32, i32, i32
  }
  func.func @transform_1(%arg0: i32) -> (i32, i32) {
    %c0_i32 = arith.constant 0 : i32
    %c0_i32_0 = arith.constant 0 : i32
    %c0_i32_1 = arith.constant 0 : i32
    return %c0_i32, %c0_i32_0 : i32, i32
  }
  func.func @transform_2(%arg0: i32) -> (i32, i32, i32, i32) {
    %c0_i32 = arith.constant 0 : i32
    %c0_i32_0 = arith.constant 0 : i32
    %c0_i32_1 = arith.constant 0 : i32
    %c0_i32_2 = arith.constant 0 : i32
    return %arg0, %c0_i32, %c0_i32_0, %c0_i32_1 : i32, i32, i32, i32
  }
  func.func @transform_3(%arg0: i32) -> (i32, i32, i32) {
    %c0_i32 = arith.constant 0 : i32
    %c0_i32_0 = arith.constant 0 : i32
    %c0_i32_1 = arith.constant 0 : i32
    return %arg0, %c0_i32, %c0_i32_0 : i32, i32, i32
  }
}

module attributes {stable_mosaic.version = 11 : i64} {
  func.func @_pw_kernel(%arg0: i32, %arg1: memref<256x128xbf16, #tpu.memory_space<vmem>>, %arg2: memref<128x128xbf16, #tpu.memory_space<vmem>>, %arg3: memref<1x128xf32, #tpu.memory_space<vmem>>, %arg4: memref<128x128xbf16, #tpu.memory_space<vmem>>, %arg5: memref<1x128xf32, #tpu.memory_space<vmem>>, %arg6: memref<256x128xf32, #tpu.memory_space<vmem>>) attributes {dimension_semantics = [#tpu.dimension_semantics<parallel>], iteration_bounds = array<i64: 2>, scalar_prefetch = 0 : i64, scratch_operands = 0 : i64, tpu.core_type = #tpu.core_type<tc>, window_params = [{transform_indices = @transform_0, window_bounds = array<i64: 256, 128>}, {pipeline_mode = #tpu.pipeline_mode<synchronous>, transform_indices = @transform_1, window_bounds = array<i64: 128, 128>}, {pipeline_mode = #tpu.pipeline_mode<synchronous>, transform_indices = @transform_2, window_bounds = array<i64: 1, 128>}, {pipeline_mode = #tpu.pipeline_mode<synchronous>, transform_indices = @transform_3, window_bounds = array<i64: 128, 128>}, {pipeline_mode = #tpu.pipeline_mode<synchronous>, transform_indices = @transform_4, window_bounds = array<i64: 1, 128>}, {transform_indices = @transform_5, window_bounds = array<i64: 256, 128>}]} {
    %c0 = arith.constant 0 : index
    %c0_0 = arith.constant 0 : index
    %0 = vector.load %arg1[%c0, %c0_0] : memref<256x128xbf16, #tpu.memory_space<vmem>>, vector<256x128xbf16>
    %c0_1 = arith.constant 0 : index
    %c0_2 = arith.constant 0 : index
    %1 = vector.load %arg2[%c0_1, %c0_2] : memref<128x128xbf16, #tpu.memory_space<vmem>>, vector<128x128xbf16>
    %cst = arith.constant dense<0.000000e+00> : vector<256x128xf32>
    %2 = tpu.matmul %0, %1, %cst {dimension_numbers = #tpu.dot_dimension_numbers<[1], [0], [0], [1], [0, 0, 1, 1], [], []>} : vector<256x128xbf16>, vector<128x128xbf16>, vector<256x128xf32> -> vector<256x128xf32>
    %c0_3 = arith.constant 0 : index
    %c0_4 = arith.constant 0 : index
    %3 = vector.load %arg3[%c0_3, %c0_4] : memref<1x128xf32, #tpu.memory_space<vmem>>, vector<1x128xf32>
    %4 = vector.broadcast %3 : vector<1x128xf32> to vector<256x128xf32>
    %5 = arith.addf %2, %4 : vector<256x128xf32>
    %cst_5 = arith.constant 0.000000e+00 : f32
    %6 = vector.broadcast %cst_5 : f32 to vector<256x128xf32>
    %7 = arith.maximumf %5, %6 : vector<256x128xf32>
    %8 = arith.truncf %7 : vector<256x128xf32> to vector<256x128xbf16>
    %c0_6 = arith.constant 0 : index
    %c0_7 = arith.constant 0 : index
    %9 = vector.load %arg4[%c0_6, %c0_7] : memref<128x128xbf16, #tpu.memory_space<vmem>>, vector<128x128xbf16>
    %cst_8 = arith.constant dense<0.000000e+00> : vector<256x128xf32>
    %10 = tpu.matmul %8, %9, %cst_8 {dimension_numbers = #tpu.dot_dimension_numbers<[1], [0], [0], [1], [0, 0, 1, 1], [], []>} : vector<256x128xbf16>, vector<128x128xbf16>, vector<256x128xf32> -> vector<256x128xf32>
    %c0_9 = arith.constant 0 : index
    %c0_10 = arith.constant 0 : index
    %11 = vector.load %arg5[%c0_9, %c0_10] : memref<1x128xf32, #tpu.memory_space<vmem>>, vector<1x128xf32>
    %12 = vector.broadcast %11 : vector<1x128xf32> to vector<256x128xf32>
    %13 = arith.addf %10, %12 : vector<256x128xf32>
    %c0_11 = arith.constant 0 : index
    %c0_12 = arith.constant 0 : index
    %14 = vector.load %arg6[%c0_11, %c0_12] : memref<256x128xf32, #tpu.memory_space<vmem>>, vector<256x128xf32>
    tpu.vector_store %arg6[%c0_11, %c0_12], %13 {strides = array<i32>} : memref<256x128xf32, #tpu.memory_space<vmem>>, vector<256x128xf32>,
    return
  }
  func.func @transform_0(%arg0: i32) -> (i32, i32) {
    %c0_i32 = arith.constant 0 : i32
    %c0_i32_0 = arith.constant 0 : i32
    return %arg0, %c0_i32 : i32, i32
  }
  func.func @transform_1(%arg0: i32) -> (i32, i32) {
    %c0_i32 = arith.constant 0 : i32
    %c0_i32_0 = arith.constant 0 : i32
    %c0_i32_1 = arith.constant 0 : i32
    return %c0_i32, %c0_i32_0 : i32, i32
  }
  func.func @transform_2(%arg0: i32) -> (i32, i32) {
    %c0_i32 = arith.constant 0 : i32
    %c0_i32_0 = arith.constant 0 : i32
    %c0_i32_1 = arith.constant 0 : i32
    return %c0_i32, %c0_i32_0 : i32, i32
  }
  func.func @transform_3(%arg0: i32) -> (i32, i32) {
    %c0_i32 = arith.constant 0 : i32
    %c0_i32_0 = arith.constant 0 : i32
    %c0_i32_1 = arith.constant 0 : i32
    return %c0_i32, %c0_i32_0 : i32, i32
  }
  func.func @transform_4(%arg0: i32) -> (i32, i32) {
    %c0_i32 = arith.constant 0 : i32
    %c0_i32_0 = arith.constant 0 : i32
    %c0_i32_1 = arith.constant 0 : i32
    return %c0_i32, %c0_i32_0 : i32, i32
  }
  func.func @transform_5(%arg0: i32) -> (i32, i32) {
    %c0_i32 = arith.constant 0 : i32
    %c0_i32_0 = arith.constant 0 : i32
    return %arg0, %c0_i32 : i32, i32
  }
}

</mosaic_0001>

<llo_original>
// kernel: block_forward.3
$region0: #{block_forward.3}
  #allocation0 [shape = 'u32[]', space=smem, size = 0x4, offset = 0x4, fixed_abs, tag = 'smem constant byte address 0x4 - core index']
  #allocation1 [shape = 'u32[72,128]{1,0:T(1,128)}', space=vmem, size = 0x9000, scoped, tag = 'internal scratch']
  %s0 = inlined_call_operand.vmem [shape: bf16[392,128], index: 0, kind: input, shape index: {}]
  %s1 = inlined_call_operand.vmem [shape: bf16[128,128], index: 1, kind: input, shape index: {}]
  %s2 = inlined_call_operand.vmem [shape: f32[1,128], index: 2, kind: input, shape index: {}]
  %s3 = inlined_call_operand.vmem [shape: bf16[128,128], index: 3, kind: input, shape index: {}]
  %s4 = inlined_call_operand.vmem [shape: f32[1,128], index: 4, kind: input, shape index: {}]
  %s5 = inlined_call_operand.vmem [shape: f32[392,128], index: 5, kind: output, shape index: {}]
  %s6 = sld [smem:[#allocation0]]
  $region101: #{block_forward.3} parent=0
    _
  %s8 = ssub.s32 1, %s6
  %s9 = scalar_select 0, %s8, %s6
  $region1: #{block_forward.3} parent=0
    #allocation2 [shape = 'u8[262144]{0}', space=vmem, size = 0x40000, scoped, tag = 'output window, operand 0']
    loop: start=0, step=1, limit=4
    $region2: #{block_forward.3} parent=1 // loop_pre_header
      _
    $region3: #{block_forward.3} parent=1 // loop_header
      %s11 = sphi 0, %s15
      %p12 = scmp.ge.s32.totalorder %s11, 4
      %s21 = sphi 0, %s23
      %s24 = sphi 0, %s21
      %s25 = sphi 0, %s24
      %s41 = sphi 0, %s25
      %s45 = sphi 0, %s45
      %s47 = sphi 0, %s45
      %s48 = sphi 0, %s47
      %s62 = sphi 0, %s48
      %s66 = sphi 0, %s66
      %s68 = sphi 0, %s66
      %s69 = sphi 0, %s68
      %s83 = sphi 0, %s69
      %s87 = sphi 0, %s87
      %s89 = sphi 0, %s87
      %s90 = sphi 0, %s89
      %s104 = sphi 0, %s90
      %s108 = sphi 0, %s108
      %s110 = sphi 0, %s108
      %s111 = sphi 0, %s110
      %s125 = sphi 0, %s111
      %s131 = sphi 0, %s133
      %s134 = sphi 0, %s131
      %s135 = sphi 0, %s134
      %s151 = sphi 0, %s135
    $region4: #{block_forward.3} parent=1 // loop_header_branch
      %14 = sbr.rel (%p12) target = $region8
    $region5: #{block_forward.3} parent=1 // loop_body
      %s16 = ssub.s32 %s11, 1
      %s17 = ssub.s32 %s11, 2
      %s18 = sadd.s32 %s11, 1
      %s19 = ssub.s32 %s11, %s18
      %p20 = scmp.eq.s32.totalorder %s19, 0
      %s22 = sadd.s32 %s21, 1
      %s23 = scalar_select %p20, %s21, %s22
      %p26 = pneg %p20
      %p27 = scmp.eq.s32.totalorder %s11, 1
      %p28 = por %p26, %p27
      %p29 = scmp.ne.s32.totalorder %s21, %s24
      %p30 = scmp.eq.s32.totalorder %s11, 0
      %p31 = por %p29, %p30
      %p32 = scmp.ne.s32.totalorder %s21, %s24
      %p33 = scmp.eq.s32.totalorder %s16, 1
      %p34 = por %p32, %p33
      %p35 = scmp.ne.s32.totalorder %s24, %s25
      %p36 = scmp.eq.s32.totalorder %s16, 0
      %p37 = por %p35, %p36
      %p38 = scmp.ne.s32.totalorder %s24, %s25
      %p39 = scmp.eq.s32.totalorder %s17, 1
      %p40 = por %p38, %p39
      %p42 = scmp.ne.s32.totalorder %s25, %s41
      %p43 = scmp.eq.s32.totalorder %s17, 0
      %p44 = por %p42, %p43
      %s46 = sadd.s32 %s45, 1
      %p49 = scmp.eq.s32.totalorder %s11, 1
      %p50 = scmp.ne.s32.totalorder %s45, %s47
      %p51 = scmp.eq.s32.totalorder %s11, 0
      %p52 = por %p50, %p51
      %p53 = scmp.ne.s32.totalorder %s45, %s47
      %p54 = scmp.eq.s32.totalorder %s16, 1
      %p55 = por %p53, %p54
      %p56 = scmp.ne.s32.totalorder %s47, %s48
      %p57 = scmp.eq.s32.totalorder %s16, 0
      %p58 = por %p56, %p57
      %p59 = scmp.ne.s32.totalorder %s47, %s48
      %p60 = scmp.eq.s32.totalorder %s17, 1
      %p61 = por %p59, %p60
      %p63 = scmp.ne.s32.totalorder %s48, %s62
      %p64 = scmp.eq.s32.totalorder %s17, 0
      %p65 = por %p63, %p64
      %s67 = sadd.s32 %s66, 1
      %p70 = scmp.eq.s32.totalorder %s11, 1
      %p71 = scmp.ne.s32.totalorder %s66, %s68
      %p72 = scmp.eq.s32.totalorder %s11, 0
      %p73 = por %p71, %p72
      %p74 = scmp.ne.s32.totalorder %s66, %s68
      %p75 = scmp.eq.s32.totalorder %s16, 1
      %p76 = por %p74, %p75
      %p77 = scmp.ne.s32.totalorder %s68, %s69
      %p78 = scmp.eq.s32.totalorder %s16, 0
      %p79 = por %p77, %p78
      %p80 = scmp.ne.s32.totalorder %s68, %s69
      %p81 = scmp.eq.s32.totalorder %s17, 1
      %p82 = por %p80, %p81
      %p84 = scmp.ne.s32.totalorder %s69, %s83
      %p85 = scmp.eq.s32.totalorder %s17, 0
      %p86 = por %p84, %p85
      %s88 = sadd.s32 %s87, 1
      %p91 = scmp.eq.s32.totalorder %s11, 1
      %p92 = scmp.ne.s32.totalorder %s87, %s89
      %p93 = scmp.eq.s32.totalorder %s11, 0
      %p94 = por %p92, %p93
      %p95 = scmp.ne.s32.totalorder %s87, %s89
      %p96 = scmp.eq.s32.totalorder %s16, 1
      %p97 = por %p95, %p96
      %p98 = scmp.ne.s32.totalorder %s89, %s90
      %p99 = scmp.eq.s32.totalorder %s16, 0
      %p100 = por %p98, %p99
      %p101 = scmp.ne.s32.totalorder %s89, %s90
      %p102 = scmp.eq.s32.totalorder %s17, 1
      %p103 = por %p101, %p102
      %p105 = scmp.ne.s32.totalorder %s90, %s104
      %p106 = scmp.eq.s32.totalorder %s17, 0
      %p107 = por %p105, %p106
      %s109 = sadd.s32 %s108, 1
      %p112 = scmp.eq.s32.totalorder %s11, 1
      %p113 = scmp.ne.s32.totalorder %s108, %s110
      %p114 = scmp.eq.s32.totalorder %s11, 0
      %p115 = por %p113, %p114
      %p116 = scmp.ne.s32.totalorder %s108, %s110
      %p117 = scmp.eq.s32.totalorder %s16, 1
      %p118 = por %p116, %p117
      %p119 = scmp.ne.s32.totalorder %s110, %s111
      %p120 = scmp.eq.s32.totalorder %s16, 0
      %p121 = por %p119, %p120
      %p122 = scmp.ne.s32.totalorder %s110, %s111
      %p123 = scmp.eq.s32.totalorder %s17, 1
      %p124 = por %p122, %p123
      %p126 = scmp.ne.s32.totalorder %s111, %s125
      %p127 = scmp.eq.s32.totalorder %s17, 0
      %p128 = por %p126, %p127
      %s129 = ssub.s32 %s11, %s18
      %p130 = scmp.eq.s32.totalorder %s129, 0
      %s132 = sadd.s32 %s131, 1
      %s133 = scalar_select %p130, %s131, %s132
      %p136 = pneg %p130
      %p137 = scmp.eq.s32.totalorder %s11, 1
      %p138 = por %p136, %p137
      %p139 = scmp.ne.s32.totalorder %s131, %s134
      %p140 = scmp.eq.s32.totalorder %s11, 0
      %p141 = por %p139, %p140
      %p142 = scmp.ne.s32.totalorder %s131, %s134
      %p143 = scmp.eq.s32.totalorder %s16, 1
      %p144 = por %p142, %p143
      %p145 = scmp.ne.s32.totalorder %s134, %s135
      %p146 = scmp.eq.s32.totalorder %s16, 0
      %p147 = por %p145, %p146
      %p148 = scmp.ne.s32.totalorder %s134, %s135
      %p149 = scmp.eq.s32.totalorder %s17, 1
      %p150 = por %p148, %p149
      %p152 = scmp.ne.s32.totalorder %s135, %s151
      %p153 = scmp.eq.s32.totalorder %s17, 0
      %p154 = por %p152, %p153
      %p155 = scmp.le.s32.totalorder 1, %s11
      %p156 = scmp.lt.s32.totalorder %s11, 3
      %p157 = pnand %p155, %p156
      %p158 = pneg %p157
      // Predicated region
      $region9: #{block_forward.3} parent=5 // pred_check
        _
      $region10: #{block_forward.3} parent=5 // pred_check_branch
        %160 = sbr.rel (%p157) target = $region12
      $region11: #{block_forward.3} parent=5 // pred_region
        %s161 = ssub.s32 %s11, 1
        // Predicated region
        $region13: #{block_forward.3} parent=11 // pred_check
          %p162 = pneg %p58
        $region14: #{block_forward.3} parent=11 // pred_check_branch
          %164 = sbr.rel (%p162) target = $region16
        $region15: #{block_forward.3} parent=11 // pred_region
          _
        $region16: #{block_forward.3} parent=11 // pred_fallthru
          _
        // Predicated region
        $region17: #{block_forward.3} parent=11 // pred_check
          %p165 = pneg %p79
        $region18: #{block_forward.3} parent=11 // pred_check_branch
          %167 = sbr.rel (%p165) target = $region20
        $region19: #{block_forward.3} parent=11 // pred_region
          _
        $region20: #{block_forward.3} parent=11 // pred_fallthru
          _
        // Predicated region
        $region21: #{block_forward.3} parent=11 // pred_check
          %p168 = pneg %p100
        $region22: #{block_forward.3} parent=11 // pred_check_branch
          %170 = sbr.rel (%p168) target = $region24
        $region23: #{block_forward.3} parent=11 // pred_region
          _
        $region24: #{block_forward.3} parent=11 // pred_fallthru
          _
        // Predicated region
        $region25: #{block_forward.3} parent=11 // pred_check
          %p171 = pneg %p121
        $region26: #{block_forward.3} parent=11 // pred_check_branch
          %173 = sbr.rel (%p171) target = $region28
        $region27: #{block_forward.3} parent=11 // pred_region
          _
        $region28: #{block_forward.3} parent=11 // pred_fallthru
          _
      $region12: #{block_forward.3} parent=5 // pred_fallthru
        _
      %p174 = scmp.lt.s32.totalorder %s11, 2
      // Predicated region
      $region29: #{block_forward.3} parent=5 // pred_check
        %p175 = pneg %p174
      $region30: #{block_forward.3} parent=5 // pred_check_branch
        %177 = sbr.rel (%p175) target = $region32
      $region31: #{block_forward.3} parent=5 // pred_region
        // Predicated region
        $region33: #{block_forward.3} parent=31 // pred_check
          %p178 = pneg %p31
        $region34: #{block_forward.3} parent=31 // pred_check_branch
          %180 = sbr.rel (%p178) target = $region36
        $region35: #{block_forward.3} parent=31 // pred_region
          %s181 = smul.u32 32, %s11
          %s182 = ssub.s32 49, %s181
          %p183 = scmp.lt.s32.totalorder %s182, 32
          %s184 = scalar_select %p183, %s182, 32
          %s185 = smul.u32 4, %s184
          %p186 = scmp.lt.s32.totalorder %s181, 48
          %s187 = scalar_select %p186, %s181, 48
          %s188 = smul.addr %s187, 4
          %s189 = scalar_lea.vmem %s0, %s188
          %s190 = smul.u32 32, %s11
          %s191 = ssub.s32 49, %s190
          %p192 = scmp.lt.s32.totalorder %s191, 32
          %s193 = scalar_select %p192, %s191, 32
          %s194 = smul.u32 4, %s193
        $region36: #{block_forward.3} parent=31 // pred_fallthru
          _
      $region32: #{block_forward.3} parent=5 // pred_fallthru
        _
      %p195 = scmp.le.s32.totalorder 1, %s11
      %p196 = scmp.lt.s32.totalorder %s11, 3
      %p197 = pnand %p195, %p196
      %p198 = pneg %p197
      // Predicated region
      $region37: #{block_forward.3} parent=5 // pred_check
        _
      $region38: #{block_forward.3} parent=5 // pred_check_branch
        %200 = sbr.rel (%p197) target = $region40
      $region39: #{block_forward.3} parent=5 // pred_region
        %s201 = ssub.s32 %s11, 1
        %s202 = smul.u32 32, %s16
        %s203 = ssub.s32 49, %s202
        %p204 = scmp.lt.s32.totalorder %s203, 32
        %s205 = scalar_select %p204, %s203, 32
        %s206 = smul.u32 4, %s205
        %p207 = scmp.lt.s32.totalorder %s202, 48
        %s208 = scalar_select %p207, %s202, 48
        %s209 = smul.addr %s208, 4
        %s210 = scalar_lea.vmem %s0, %s209
        %p211 = pneg %p37
        %p212 = pneg %p34
        %p213 = pneg %p58
        %p214 = pneg %p55
        %p215 = pneg %p79
        %p216 = pneg %p76
        %p217 = pneg %p100
        %p218 = pneg %p97
        %p219 = pneg %p121
        %p220 = pneg %p118
        %p221 = pneg %p147
        %p222 = pneg %p144
        %s223 = sand.u32 %s134, 1
        %s224 = sand.u32 %s134, 1
        %s225 = smul.addr %s224, 256
        %s226 = scalar_lea.vmem [#allocation2], %s225
        %s227 = smul.u32 32, %s16
        %s228 = ssub.s32 49, %s227
        %p229 = scmp.lt.s32.totalorder %s228, 32
        %s230 = scalar_select %p229, %s228, 32
        %s231 = smul.u32 4, %s230
        %p232 = scmp.lt.s32.totalorder %s227, 48
        %s233 = scalar_select %p232, %s227, 48
        %s234 = smul.addr %s233, 4
        %s235 = scalar_lea.vmem %s0, %s234
        %s236 = smul.u32 32, %s16
        %s237 = ssub.s32 49, %s236
        %p238 = scmp.lt.s32.totalorder %s237, 32
        %s239 = scalar_select %p238, %s237, 32
        %s240 = smul.u32 4, %s239
        %s241 = smul.u32 32, %s16
        %s242 = ssub.s32 49, %s241
        %p243 = scmp.lt.s32.totalorder %s242, 32
        %s244 = scalar_select %p243, %s242, 32
        %s245 = smul.u32 8, %s244
        %v246 = vld [vmem:[%s235] sm:$0xf]
        %v247 = vld [vmem:[%s235 + $0x4] sm:$0xf]
        %v248 = vld [vmem:[%s235 + $0x8] sm:$0xf]
        %v249 = vld [vmem:[%s235 + $0xc] sm:$0xf]
        %v250 = vld [vmem:[%s235 + $0x10] sm:$0xf]
        %v251 = vld [vmem:[%s235 + $0x14] sm:$0xf]
        %v252 = vld [vmem:[%s235 + $0x18] sm:$0xf]
        %v253 = vld [vmem:[%s235 + $0x1c] sm:$0xf]
        %v254 = vld [vmem:[%s235 + $0x20] sm:$0xf]
        %v255 = vld [vmem:[%s235 + $0x24] sm:$0xf]
        %v256 = vld [vmem:[%s235 + $0x28] sm:$0xf]
        %v257 = vld [vmem:[%s235 + $0x2c] sm:$0xf]
        %v258 = vld [vmem:[%s235 + $0x30] sm:$0xf]
        %v259 = vld [vmem:[%s235 + $0x34] sm:$0xf]
        %v260 = vld [vmem:[%s235 + $0x38] sm:$0xf]
        %v261 = vld [vmem:[%s235 + $0x3c] sm:$0xf]
        %v262 = vld [vmem:[%s235 + $0x40] sm:$0xf]
        %v263 = vld [vmem:[%s235 + $0x44] sm:$0xf]
        %v264 = vld [vmem:[%s235 + $0x48] sm:$0xf]
        %v265 = vld [vmem:[%s235 + $0x4c] sm:$0xf]
        %v266 = vld [vmem:[%s235 + $0x50] sm:$0xf]
        %v267 = vld [vmem:[%s235 + $0x54] sm:$0xf]
        %v268 = vld [vmem:[%s235 + $0x58] sm:$0xf]
        %v269 = vld [vmem:[%s235 + $0x5c] sm:$0xf]
        %v270 = vld [vmem:[%s235 + $0x60] sm:$0xf]
        %v271 = vld [vmem:[%s235 + $0x64] sm:$0xf]
        %v272 = vld [vmem:[%s235 + $0x68] sm:$0xf]
        %v273 = vld [vmem:[%s235 + $0x6c] sm:$0xf]
        %v274 = vld [vmem:[%s235 + $0x70] sm:$0xf]
        %v275 = vld [vmem:[%s235 + $0x74] sm:$0xf]
        %v276 = vld [vmem:[%s235 + $0x78] sm:$0xf]
        %v277 = vld [vmem:[%s235 + $0x7c] sm:$0xf]
        %v278 = vld [vmem:[%s1] sm:$0xf]
        %v279 = vld [vmem:[%s1 + $0x4] sm:$0xf]
        %v280 = vld [vmem:[%s1 + $0x8] sm:$0xf]
        %v281 = vld [vmem:[%s1 + $0xc] sm:$0xf]
        %v282 = vld [vmem:[%s1 + $0x10] sm:$0xf]
        %v283 = vld [vmem:[%s1 + $0x14] sm:$0xf]
        %v284 = vld [vmem:[%s1 + $0x18] sm:$0xf]
        %v285 = vld [vmem:[%s1 + $0x1c] sm:$0xf]
        %v286 = vld [vmem:[%s1 + $0x20] sm:$0xf]
        %v287 = vld [vmem:[%s1 + $0x24] sm:$0xf]
        %v288 = vld [vmem:[%s1 + $0x28] sm:$0xf]
        %v289 = vld [vmem:[%s1 + $0x2c] sm:$0xf]
        %v290 = vld [vmem:[%s1 + $0x30] sm:$0xf]
        %v291 = vld [vmem:[%s1 + $0x34] sm:$0xf]
        %v292 = vld [vmem:[%s1 + $0x38] sm:$0xf]
        %v293 = vld [vmem:[%s1 + $0x3c] sm:$0xf]
        %v294 = vld [vmem:[%s2] sm:$0x1]
        %v296 = vperm.slane %v294, 0
        %v330 = vunpack.c.l.b16 %v246
        %v331 = vunpack.c.l.b16 %v247
        %v332 = vunpack.c.l.b16 %v248
        %v333 = vunpack.c.l.b16 %v249
        %v334 = vunpack.c.l.b16 %v250
        %v335 = vunpack.c.l.b16 %v251
        %v336 = vunpack.c.l.b16 %v252
        %v337 = vunpack.c.l.b16 %v253
        %v338 = vunpack.c.l.b16 %v254
        %v339 = vunpack.c.l.b16 %v255
        %v340 = vunpack.c.l.b16 %v256
        %v341 = vunpack.c.l.b16 %v257
        %v342 = vunpack.c.l.b16 %v258
        %v343 = vunpack.c.l.b16 %v259
        %v344 = vunpack.c.l.b16 %v260
        %v345 = vunpack.c.l.b16 %v261
        %v346 = vunpack.c.l.b16 %v262
        %v347 = vunpack.c.l.b16 %v263
        %v348 = vunpack.c.l.b16 %v264
        %v349 = vunpack.c.l.b16 %v265
        %v350 = vunpack.c.l.b16 %v266
        %v351 = vunpack.c.l.b16 %v267
        %v352 = vunpack.c.l.b16 %v268
        %v353 = vunpack.c.l.b16 %v269
        %v354 = vunpack.c.l.b16 %v270
        %v355 = vunpack.c.l.b16 %v271
        %v356 = vunpack.c.l.b16 %v272
        %v357 = vunpack.c.l.b16 %v273
        %v358 = vunpack.c.l.b16 %v274
        %v359 = vunpack.c.l.b16 %v275
        %v360 = vunpack.c.l.b16 %v276
        %v361 = vunpack.c.l.b16 %v277
        %v362 = vpack.c.b16 %v331, %v330
        %v363 = vpack.c.b16 %v333, %v332
        %v364 = vpack.c.b16 %v335, %v334
        %v365 = vpack.c.b16 %v337, %v336
        %v366 = vpack.c.b16 %v339, %v338
        %v367 = vpack.c.b16 %v341, %v340
        %v368 = vpack.c.b16 %v343, %v342
        %v369 = vpack.c.b16 %v345, %v344
        %v370 = vpack.c.b16 %v347, %v346
        %v371 = vpack.c.b16 %v349, %v348
        %v372 = vpack.c.b16 %v351, %v350
        %v373 = vpack.c.b16 %v353, %v352
        %v374 = vpack.c.b16 %v355, %v354
        %v375 = vpack.c.b16 %v357, %v356
        %v376 = vpack.c.b16 %v359, %v358
        %v377 = vpack.c.b16 %v361, %v360
        %v410 = vunpack.c.l.b16 %v278
        %v411 = vunpack.c.l.b16 %v279
        %v412 = vunpack.c.l.b16 %v280
        %v413 = vunpack.c.l.b16 %v281
        %v414 = vunpack.c.l.b16 %v282
        %v415 = vunpack.c.l.b16 %v283
        %v416 = vunpack.c.l.b16 %v284
        %v417 = vunpack.c.l.b16 %v285
        %v418 = vunpack.c.l.b16 %v286
        %v419 = vunpack.c.l.b16 %v287
        %v420 = vunpack.c.l.b16 %v288
        %v421 = vunpack.c.l.b16 %v289
        %v422 = vunpack.c.l.b16 %v290
        %v423 = vunpack.c.l.b16 %v291
        %v424 = vunpack.c.l.b16 %v292
        %v425 = vunpack.c.l.b16 %v293
        %v426 = vpack.c.b16 %v411, %v410
        %v427 = vpack.c.b16 %v413, %v412
        %v428 = vpack.c.b16 %v415, %v414
        %v429 = vpack.c.b16 %v417, %v416
        %v430 = vpack.c.b16 %v419, %v418
        %v431 = vpack.c.b16 %v421, %v420
        %v432 = vpack.c.b16 %v423, %v422
        %v433 = vpack.c.b16 %v425, %v424
        %442 = vmatpush.bf16.msra.mxu0 %v433
        %443 = vmatpush.bf16.msra.mxu0 %v432
        %444 = vmatpush.bf16.msra.mxu0 %v431
        %445 = vmatpush.bf16.msra.mxu0 %v430
        %446 = vmatpush.bf16.msra.mxu0 %v429
        %447 = vmatpush.bf16.msra.mxu0 %v428
        %448 = vmatpush.bf16.msra.mxu0 %v427
        %449 = vmatpush.bf16.msra.mxu0 %v426
        %450 = vmatmul.bf16.gmra.mxu0 %v362
        %v451 = vpop.f32.mrf.mxu0
        %v452 = vadd.f32 %v296, %v451
        %v453 = vpop.f32.mrf.mxu0
        %v454 = vadd.f32 %v296, %v453
        %455 = vmatmul.bf16.gmra.mxu0 %v363
        %v456 = vpop.f32.mrf.mxu0
        %v457 = vadd.f32 %v296, %v456
        %v458 = vpop.f32.mrf.mxu0
        %v459 = vadd.f32 %v296, %v458
        %460 = vmatmul.bf16.gmra.mxu0 %v364
        %v461 = vpop.f32.mrf.mxu0
        %v462 = vadd.f32 %v296, %v461
        %v463 = vpop.f32.mrf.mxu0
        %v464 = vadd.f32 %v296, %v463
        %465 = vmatmul.bf16.gmra.mxu0 %v365
        %v466 = vpop.f32.mrf.mxu0
        %v467 = vadd.f32 %v296, %v466
        %v468 = vpop.f32.mrf.mxu0
        %v469 = vadd.f32 %v296, %v468
        %470 = vmatmul.bf16.gmra.mxu0 %v366
        %v471 = vpop.f32.mrf.mxu0
        %v472 = vadd.f32 %v296, %v471
        %v473 = vpop.f32.mrf.mxu0
        %v474 = vadd.f32 %v296, %v473
        %475 = vmatmul.bf16.gmra.mxu0 %v367
        %v476 = vpop.f32.mrf.mxu0
        %v477 = vadd.f32 %v296, %v476
        %v478 = vpop.f32.mrf.mxu0
        %v479 = vadd.f32 %v296, %v478
        %480 = vmatmul.bf16.gmra.mxu0 %v368
        %v481 = vpop.f32.mrf.mxu0
        %v482 = vadd.f32 %v296, %v481
        %v483 = vpop.f32.mrf.mxu0
        %v484 = vadd.f32 %v296, %v483
        %485 = vmatmul.bf16.gmra.mxu0 %v369
        %v486 = vpop.f32.mrf.mxu0
        %v487 = vadd.f32 %v296, %v486
        %v488 = vpop.f32.mrf.mxu0
        %v489 = vadd.f32 %v296, %v488
        %490 = vmatmul.bf16.gmra.mxu0 %v370
        %v491 = vpop.f32.mrf.mxu0
        %v492 = vadd.f32 %v296, %v491
        %v493 = vpop.f32.mrf.mxu0
        %v494 = vadd.f32 %v296, %v493
        %495 = vmatmul.bf16.gmra.mxu0 %v371
        %v496 = vpop.f32.mrf.mxu0
        %v497 = vadd.f32 %v296, %v496
        %v498 = vpop.f32.mrf.mxu0
        %v499 = vadd.f32 %v296, %v498
        %500 = vmatmul.bf16.gmra.mxu0 %v372
        %v501 = vpop.f32.mrf.mxu0
        %v502 = vadd.f32 %v296, %v501
        %v503 = vpop.f32.mrf.mxu0
        %v504 = vadd.f32 %v296, %v503
        %505 = vmatmul.bf16.gmra.mxu0 %v373
        %v506 = vpop.f32.mrf.mxu0
        %v507 = vadd.f32 %v296, %v506
        %v508 = vpop.f32.mrf.mxu0
        %v509 = vadd.f32 %v296, %v508
        %510 = vmatmul.bf16.gmra.mxu0 %v374
        %v511 = vpop.f32.mrf.mxu0
        %v512 = vadd.f32 %v296, %v511
        %v513 = vpop.f32.mrf.mxu0
        %v514 = vadd.f32 %v296, %v513
        %515 = vmatmul.bf16.gmra.mxu0 %v375
        %v516 = vpop.f32.mrf.mxu0
        %v517 = vadd.f32 %v296, %v516
        %v518 = vpop.f32.mrf.mxu0
        %v519 = vadd.f32 %v296, %v518
        %520 = vmatmul.bf16.gmra.mxu0 %v376
        %v521 = vpop.f32.mrf.mxu0
        %v522 = vadd.f32 %v296, %v521
        %v523 = vpop.f32.mrf.mxu0
        %v524 = vadd.f32 %v296, %v523
        %525 = vmatmul.bf16.gmra.mxu0 %v377
        %v526 = vpop.f32.mrf.mxu0
        %v527 = vadd.f32 %v296, %v526
        %v528 = vpop.f32.mrf.mxu0
        %v529 = vadd.f32 %v296, %v528
        %530 = vdwg.mxu0
        %v531 = vmax.f32 %v452, 0.0
        %v532 = vmax.f32 %v454, 0.0
        %v533 = vmax.f32 %v457, 0.0
        %v534 = vmax.f32 %v459, 0.0
        %v535 = vmax.f32 %v462, 0.0
        %v536 = vmax.f32 %v464, 0.0
        %v537 = vmax.f32 %v467, 0.0
        %v538 = vmax.f32 %v469, 0.0
        %v539 = vmax.f32 %v472, 0.0
        %v540 = vmax.f32 %v474, 0.0
        %v541 = vmax.f32 %v477, 0.0
        %v542 = vmax.f32 %v479, 0.0
        %v543 = vmax.f32 %v482, 0.0
        %v544 = vmax.f32 %v484, 0.0
        %v545 = vmax.f32 %v487, 0.0
        %v546 = vmax.f32 %v489, 0.0
        %v547 = vmax.f32 %v492, 0.0
        %v548 = vmax.f32 %v494, 0.0
        %v549 = vmax.f32 %v497, 0.0
        %v550 = vmax.f32 %v499, 0.0
        %v551 = vmax.f32 %v502, 0.0
        %v552 = vmax.f32 %v504, 0.0
        %v553 = vmax.f32 %v507, 0.0
        %v554 = vmax.f32 %v509, 0.0
        %v555 = vmax.f32 %v512, 0.0
        %v556 = vmax.f32 %v514, 0.0
        %v557 = vmax.f32 %v517, 0.0
        %v558 = vmax.f32 %v519, 0.0
        %v559 = vmax.f32 %v522, 0.0
        %v560 = vmax.f32 %v524, 0.0
        %v561 = vmax.f32 %v527, 0.0
        %v562 = vmax.f32 %v529, 0.0
        %v563 = vpack.c.bf16 %v532, %v531
        %v564 = vpack.c.bf16 %v534, %v533
        %v565 = vpack.c.bf16 %v536, %v535
        %v566 = vpack.c.bf16 %v538, %v537
        %v567 = vpack.c.bf16 %v540, %v539
        %v568 = vpack.c.bf16 %v542, %v541
        %v569 = vpack.c.bf16 %v544, %v543
        %v570 = vpack.c.bf16 %v546, %v545
        %v571 = vpack.c.bf16 %v548, %v547
        %v572 = vpack.c.bf16 %v550, %v549
        %v573 = vpack.c.bf16 %v552, %v551
        %v574 = vpack.c.bf16 %v554, %v553
        %v575 = vpack.c.bf16 %v556, %v555
        %v576 = vpack.c.bf16 %v558, %v557
        %v577 = vpack.c.bf16 %v560, %v559
        %v578 = vpack.c.bf16 %v562, %v561
        %v579 = vld [vmem:[%s3] sm:$0xf]
        %v580 = vld [vmem:[%s3 + $0x4] sm:$0xf]
        %v581 = vld [vmem:[%s3 + $0x8] sm:$0xf]
        %v582 = vld [vmem:[%s3 + $0xc] sm:$0xf]
        %v583 = vld [vmem:[%s3 + $0x10] sm:$0xf]
        %v584 = vld [vmem:[%s3 + $0x14] sm:$0xf]
        %v585 = vld [vmem:[%s3 + $0x18] sm:$0xf]
        %v586 = vld [vmem:[%s3 + $0x1c] sm:$0xf]
        %v587 = vld [vmem:[%s3 + $0x20] sm:$0xf]
        %v588 = vld [vmem:[%s3 + $0x24] sm:$0xf]
        %v589 = vld [vmem:[%s3 + $0x28] sm:$0xf]
        %v590 = vld [vmem:[%s3 + $0x2c] sm:$0xf]
        %v591 = vld [vmem:[%s3 + $0x30] sm:$0xf]
        %v592 = vld [vmem:[%s3 + $0x34] sm:$0xf]
        %v593 = vld [vmem:[%s3 + $0x38] sm:$0xf]
        %v594 = vld [vmem:[%s3 + $0x3c] sm:$0xf]
        %v595 = vld [vmem:[%s4] sm:$0x1]
        %v597 = vperm.slane %v595, 0
        %v615 = vunpack.c.l.b16 %v579
        %v616 = vunpack.c.l.b16 %v580
        %v617 = vunpack.c.l.b16 %v581
        %v618 = vunpack.c.l.b16 %v582
        %v619 = vunpack.c.l.b16 %v583
        %v620 = vunpack.c.l.b16 %v584
        %v621 = vunpack.c.l.b16 %v585
        %v622 = vunpack.c.l.b16 %v586
        %v623 = vunpack.c.l.b16 %v587
        %v624 = vunpack.c.l.b16 %v588
        %v625 = vunpack.c.l.b16 %v589
        %v626 = vunpack.c.l.b16 %v590
        %v627 = vunpack.c.l.b16 %v591
        %v628 = vunpack.c.l.b16 %v592
        %v629 = vunpack.c.l.b16 %v593
        %v630 = vunpack.c.l.b16 %v594
        %v631 = vpack.c.b16 %v616, %v615
        %v632 = vpack.c.b16 %v618, %v617
        %v633 = vpack.c.b16 %v620, %v619
        %v634 = vpack.c.b16 %v622, %v621
        %v635 = vpack.c.b16 %v624, %v623
        %v636 = vpack.c.b16 %v626, %v625
        %v637 = vpack.c.b16 %v628, %v627
        %v638 = vpack.c.b16 %v630, %v629
        %647 = vmatpush.bf16.msra.mxu0 %v638
        %648 = vmatpush.bf16.msra.mxu0 %v637
        %649 = vmatpush.bf16.msra.mxu0 %v636
        %650 = vmatpush.bf16.msra.mxu0 %v635
        %651 = vmatpush.bf16.msra.mxu0 %v634
        %652 = vmatpush.bf16.msra.mxu0 %v633
        %653 = vmatpush.bf16.msra.mxu0 %v632
        %654 = vmatpush.bf16.msra.mxu0 %v631
        %655 = vmatmul.bf16.gmra.mxu0 %v563
        %v656 = vpop.f32.mrf.mxu0
        %v657 = vadd.f32 %v597, %v656
        %v658 = vpop.f32.mrf.mxu0
        %v659 = vadd.f32 %v597, %v658
        %660 = vmatmul.bf16.gmra.mxu0 %v564
        %v661 = vpop.f32.mrf.mxu0
        %v662 = vadd.f32 %v597, %v661
        %v663 = vpop.f32.mrf.mxu0
        %v664 = vadd.f32 %v597, %v663
        %665 = vmatmul.bf16.gmra.mxu0 %v565
        %v666 = vpop.f32.mrf.mxu0
        %v667 = vadd.f32 %v597, %v666
        %v668 = vpop.f32.mrf.mxu0
        %v669 = vadd.f32 %v597, %v668
        %670 = vmatmul.bf16.gmra.mxu0 %v566
        %v671 = vpop.f32.mrf.mxu0
        %v672 = vadd.f32 %v597, %v671
        %v673 = vpop.f32.mrf.mxu0
        %v674 = vadd.f32 %v597, %v673
        %675 = vmatmul.bf16.gmra.mxu0 %v567
        %v676 = vpop.f32.mrf.mxu0
        %v677 = vadd.f32 %v597, %v676
        %v678 = vpop.f32.mrf.mxu0
        %v679 = vadd.f32 %v597, %v678
        %680 = vmatmul.bf16.gmra.mxu0 %v568
        %v681 = vpop.f32.mrf.mxu0
        %v682 = vadd.f32 %v597, %v681
        %v683 = vpop.f32.mrf.mxu0
        %v684 = vadd.f32 %v597, %v683
        %685 = vmatmul.bf16.gmra.mxu0 %v569
        %v686 = vpop.f32.mrf.mxu0
        %v687 = vadd.f32 %v597, %v686
        %v688 = vpop.f32.mrf.mxu0
        %v689 = vadd.f32 %v597, %v688
        %690 = vmatmul.bf16.gmra.mxu0 %v570
        %v691 = vpop.f32.mrf.mxu0
        %v692 = vadd.f32 %v597, %v691
        %v693 = vpop.f32.mrf.mxu0
        %v694 = vadd.f32 %v597, %v693
        %695 = vmatmul.bf16.gmra.mxu0 %v571
        %v696 = vpop.f32.mrf.mxu0
        %v697 = vadd.f32 %v597, %v696
        %v698 = vpop.f32.mrf.mxu0
        %v699 = vadd.f32 %v597, %v698
        %700 = vmatmul.bf16.gmra.mxu0 %v572
        %v701 = vpop.f32.mrf.mxu0
        %v702 = vadd.f32 %v597, %v701
        %v703 = vpop.f32.mrf.mxu0
        %v704 = vadd.f32 %v597, %v703
        %705 = vmatmul.bf16.gmra.mxu0 %v573
        %v706 = vpop.f32.mrf.mxu0
        %v707 = vadd.f32 %v597, %v706
        %v708 = vpop.f32.mrf.mxu0
        %v709 = vadd.f32 %v597, %v708
        %710 = vmatmul.bf16.gmra.mxu0 %v574
        %v711 = vpop.f32.mrf.mxu0
        %v712 = vadd.f32 %v597, %v711
        %v713 = vpop.f32.mrf.mxu0
        %v714 = vadd.f32 %v597, %v713
        %715 = vmatmul.bf16.gmra.mxu0 %v575
        %v716 = vpop.f32.mrf.mxu0
        %v717 = vadd.f32 %v597, %v716
        %v718 = vpop.f32.mrf.mxu0
        %v719 = vadd.f32 %v597, %v718
        %720 = vmatmul.bf16.gmra.mxu0 %v576
        %v721 = vpop.f32.mrf.mxu0
        %v722 = vadd.f32 %v597, %v721
        %v723 = vpop.f32.mrf.mxu0
        %v724 = vadd.f32 %v597, %v723
        %725 = vmatmul.bf16.gmra.mxu0 %v577
        %v726 = vpop.f32.mrf.mxu0
        %v727 = vadd.f32 %v597, %v726
        %v728 = vpop.f32.mrf.mxu0
        %v729 = vadd.f32 %v597, %v728
        %730 = vmatmul.bf16.gmra.mxu0 %v578
        %v731 = vpop.f32.mrf.mxu0
        %v732 = vadd.f32 %v597, %v731
        %v733 = vpop.f32.mrf.mxu0
        %v734 = vadd.f32 %v597, %v733
        %735 = vdwg.mxu0
        %736 = vst [vmem:[%s226] sm:$0xff] %v657
        %737 = vst [vmem:[%s226 + $0x8] sm:$0xff] %v659
        %738 = vst [vmem:[%s226 + $0x10] sm:$0xff] %v662
        %739 = vst [vmem:[%s226 + $0x18] sm:$0xff] %v664
        %740 = vst [vmem:[%s226 + $0x20] sm:$0xff] %v667
        %741 = vst [vmem:[%s226 + $0x28] sm:$0xff] %v669
        %742 = vst [vmem:[%s226 + $0x30] sm:$0xff] %v672
        %743 = vst [vmem:[%s226 + $0x38] sm:$0xff] %v674
        %744 = vst [vmem:[%s226 + $0x40] sm:$0xff] %v677
        %745 = vst [vmem:[%s226 + $0x48] sm:$0xff] %v679
        %746 = vst [vmem:[%s226 + $0x50] sm:$0xff] %v682
        %747 = vst [vmem:[%s226 + $0x58] sm:$0xff] %v684
        %748 = vst [vmem:[%s226 + $0x60] sm:$0xff] %v687
        %749 = vst [vmem:[%s226 + $0x68] sm:$0xff] %v689
        %750 = vst [vmem:[%s226 + $0x70] sm:$0xff] %v692
        %751 = vst [vmem:[%s226 + $0x78] sm:$0xff] %v694
        %752 = vst [vmem:[%s226 + $0x80] sm:$0xff] %v697
        %753 = vst [vmem:[%s226 + $0x88] sm:$0xff] %v699
        %754 = vst [vmem:[%s226 + $0x90] sm:$0xff] %v702
        %755 = vst [vmem:[%s226 + $0x98] sm:$0xff] %v704
        %756 = vst [vmem:[%s226 + $0xa0] sm:$0xff] %v707
        %757 = vst [vmem:[%s226 + $0xa8] sm:$0xff] %v709
        %758 = vst [vmem:[%s226 + $0xb0] sm:$0xff] %v712
        %759 = vst [vmem:[%s226 + $0xb8] sm:$0xff] %v714
        %760 = vst [vmem:[%s226 + $0xc0] sm:$0xff] %v717
        %761 = vst [vmem:[%s226 + $0xc8] sm:$0xff] %v719
        %762 = vst [vmem:[%s226 + $0xd0] sm:$0xff] %v722
        %763 = vst [vmem:[%s226 + $0xd8] sm:$0xff] %v724
        %764 = vst [vmem:[%s226 + $0xe0] sm:$0xff] %v727
        %765 = vst [vmem:[%s226 + $0xe8] sm:$0xff] %v729
        %766 = vst [vmem:[%s226 + $0xf0] sm:$0xff] %v732
        %767 = vst [vmem:[%s226 + $0xf8] sm:$0xff] %v734
        %s768 = sand.u32 %s134, 1
        %s769 = sand.u32 %s134, 1
        %s770 = smul.addr %s769, 256
        %s771 = scalar_lea.vmem [#allocation2], %s770
        // Predicated region
        $region41: #{block_forward.3} parent=39 // pred_check
          %p772 = pneg %p144
        $region42: #{block_forward.3} parent=39 // pred_check_branch
          %774 = sbr.rel (%p772) target = $region44
        $region43: #{block_forward.3} parent=39 // pred_region
          %s775 = smul.u32 32, %s16
          %s776 = ssub.s32 49, %s775
          %p777 = scmp.lt.s32.totalorder %s776, 32
          %s778 = scalar_select %p777, %s776, 32
          %s779 = smul.u32 8, %s778
          %p780 = scmp.ne.s32.totalorder 0, %s779
          %s781 = smul.addr %s775, 8
          %s782 = scalar_lea.vmem %s5, %s781
          // Predicated region
          $region45: #{block_forward.3} parent=43 // pred_check
            %p783 = pneg %p780
          $region46: #{block_forward.3} parent=43 // pred_check_branch
            %785 = sbr.rel (%p783) target = $region48
          $region47: #{block_forward.3} parent=43 // pred_region
            // Predicated region
            $region49: #{block_forward.3} parent=47 // pred_check
              _
            $region50: #{block_forward.3} parent=47 // pred_check_branch
              %787 = sbr.rel (0) target = $region52
            $region51: #{block_forward.3} parent=47 // pred_region
              // Predicated region
              $region71: #{block_forward.3} parent=51 // pred_check
                _
              $region72: #{block_forward.3} parent=51 // pred_check_branch
                %899 = sbr.rel (0) target = $region74
              $region73: #{block_forward.3} parent=51 // pred_region
                %s900 = sshrl.u32 %s778, 5
                // While loop
                $region75: #{block_forward.3} parent=73 // loop_pre_header
                  _
                $region76: #{block_forward.3} parent=73 // loop_header
                  %s902 = sphi 0, %s904
                  %p903 = scmp.ge.s32.totalorder %s902, %s900
                  %s907 = sphi 0, %s976
                  %s908 = sphi %s771, %s979
                  %s909 = sphi %s782, %s980
                $region77: #{block_forward.3} parent=73 // loop_header_branch
                  %906 = sbr.rel (%p903) target = $region81
                $region78: #{block_forward.3} parent=73 // loop_body
                  %v910 = vld [vmem:[%s908] sm:$0xff]
                  %911 = vst [vmem:[%s909] sm:$0xff] %v910
                  %v912 = vld [vmem:[%s908 + $0x8] sm:$0xff]
                  %913 = vst [vmem:[%s909 + $0x8] sm:$0xff] %v912
                  %v914 = vld [vmem:[%s908 + $0x10] sm:$0xff]
                  %915 = vst [vmem:[%s909 + $0x10] sm:$0xff] %v914
                  %v916 = vld [vmem:[%s908 + $0x18] sm:$0xff]
                  %917 = vst [vmem:[%s909 + $0x18] sm:$0xff] %v916
                  %v918 = vld [vmem:[%s908 + $0x20] sm:$0xff]
                  %919 = vst [vmem:[%s909 + $0x20] sm:$0xff] %v918
                  %v920 = vld [vmem:[%s908 + $0x28] sm:$0xff]
                  %921 = vst [vmem:[%s909 + $0x28] sm:$0xff] %v920
                  %v922 = vld [vmem:[%s908 + $0x30] sm:$0xff]
                  %923 = vst [vmem:[%s909 + $0x30] sm:$0xff] %v922
                  %v924 = vld [vmem:[%s908 + $0x38] sm:$0xff]
                  %925 = vst [vmem:[%s909 + $0x38] sm:$0xff] %v924
                  %v926 = vld [vmem:[%s908 + $0x40] sm:$0xff]
                  %927 = vst [vmem:[%s909 + $0x40] sm:$0xff] %v926
                  %v928 = vld [vmem:[%s908 + $0x48] sm:$0xff]
                  %929 = vst [vmem:[%s909 + $0x48] sm:$0xff] %v928
                  %v930 = vld [vmem:[%s908 + $0x50] sm:$0xff]
                  %931 = vst [vmem:[%s909 + $0x50] sm:$0xff] %v930
                  %v932 = vld [vmem:[%s908 + $0x58] sm:$0xff]
                  %933 = vst [vmem:[%s909 + $0x58] sm:$0xff] %v932
                  %v934 = vld [vmem:[%s908 + $0x60] sm:$0xff]
                  %935 = vst [vmem:[%s909 + $0x60] sm:$0xff] %v934
                  %v936 = vld [vmem:[%s908 + $0x68] sm:$0xff]
                  %937 = vst [vmem:[%s909 + $0x68] sm:$0xff] %v936
                  %v938 = vld [vmem:[%s908 + $0x70] sm:$0xff]
                  %939 = vst [vmem:[%s909 + $0x70] sm:$0xff] %v938
                  %v940 = vld [vmem:[%s908 + $0x78] sm:$0xff]
                  %941 = vst [vmem:[%s909 + $0x78] sm:$0xff] %v940
                  %v942 = vld [vmem:[%s908 + $0x80] sm:$0xff]
                  %943 = vst [vmem:[%s909 + $0x80] sm:$0xff] %v942
                  %v944 = vld [vmem:[%s908 + $0x88] sm:$0xff]
                  %945 = vst [vmem:[%s909 + $0x88] sm:$0xff] %v944
                  %v946 = vld [vmem:[%s908 + $0x90] sm:$0xff]
                  %947 = vst [vmem:[%s909 + $0x90] sm:$0xff] %v946
                  %v948 = vld [vmem:[%s908 + $0x98] sm:$0xff]
                  %949 = vst [vmem:[%s909 + $0x98] sm:$0xff] %v948
                  %v950 = vld [vmem:[%s908 + $0xa0] sm:$0xff]
                  %951 = vst [vmem:[%s909 + $0xa0] sm:$0xff] %v950
                  %v952 = vld [vmem:[%s908 + $0xa8] sm:$0xff]
                  %953 = vst [vmem:[%s909 + $0xa8] sm:$0xff] %v952
                  %v954 = vld [vmem:[%s908 + $0xb0] sm:$0xff]
                  %955 = vst [vmem:[%s909 + $0xb0] sm:$0xff] %v954
                  %v956 = vld [vmem:[%s908 + $0xb8] sm:$0xff]
                  %957 = vst [vmem:[%s909 + $0xb8] sm:$0xff] %v956
                  %v958 = vld [vmem:[%s908 + $0xc0] sm:$0xff]
                  %959 = vst [vmem:[%s909 + $0xc0] sm:$0xff] %v958
                  %v960 = vld [vmem:[%s908 + $0xc8] sm:$0xff]
                  %961 = vst [vmem:[%s909 + $0xc8] sm:$0xff] %v960
                  %v962 = vld [vmem:[%s908 + $0xd0] sm:$0xff]
                  %963 = vst [vmem:[%s909 + $0xd0] sm:$0xff] %v962
                  %v964 = vld [vmem:[%s908 + $0xd8] sm:$0xff]
                  %965 = vst [vmem:[%s909 + $0xd8] sm:$0xff] %v964
                  %v966 = vld [vmem:[%s908 + $0xe0] sm:$0xff]
                  %967 = vst [vmem:[%s909 + $0xe0] sm:$0xff] %v966
                  %v968 = vld [vmem:[%s908 + $0xe8] sm:$0xff]
                  %969 = vst [vmem:[%s909 + $0xe8] sm:$0xff] %v968
                  %v970 = vld [vmem:[%s908 + $0xf0] sm:$0xff]
                  %971 = vst [vmem:[%s909 + $0xf0] sm:$0xff] %v970
                  %v972 = vld [vmem:[%s908 + $0xf8] sm:$0xff]
                  %973 = vst [vmem:[%s909 + $0xf8] sm:$0xff] %v972
                  %s974 = sadd.s32 1, %s907
                  %p975 = scmp.ge.s32.totalorder %s974, %s900
                  %s976 = scalar_select %p975, 0, %s974
                  %s977 = smul.u32 %s976, 256
                  %s978 = smul.u32 %s976, 256
                  %s979 = scalar_lea.vmem %s771, %s977 [#allocation2]
                  %s980 = scalar_lea.vmem %s782, %s978
                $region79: #{block_forward.3} parent=73 // loop_footer
                  %s904 = sadd.s32 %s902, 1
                $region80: #{block_forward.3} parent=73 // loop_footer_branch
                  %901 = sbr.rel target = $region76
                $region81: #{block_forward.3} parent=73 // loop_exit
                  _
                %s981 = sshrl.u32 %s778, 5
                %s982 = sand.u32 %s778, 31
                %s983 = smul.u32 %s981, 32
                %s984 = smul.u32 8, %s983
                %s985 = scalar_lea.vmem %s771, %s984 [#allocation2]
                %s986 = smul.u32 8, %s983
                %s987 = scalar_lea.vmem %s782, %s986
                // While loop
                $region82: #{block_forward.3} parent=73 // loop_pre_header
                  _
                $region83: #{block_forward.3} parent=73 // loop_header
                  %s989 = sphi 0, %s991
                  %p990 = scmp.ge.s32.totalorder %s989, %s982
                  %s994 = sphi 0, %s1001
                  %s995 = sphi %s985, %s1004
                  %s996 = sphi %s987, %s1005
                $region84: #{block_forward.3} parent=73 // loop_header_branch
                  %993 = sbr.rel (%p990) target = $region88
                $region85: #{block_forward.3} parent=73 // loop_body
                  %v997 = vld [vmem:[%s995] sm:$0xff]
                  %998 = vst [vmem:[%s996] sm:$0xff] %v997
                  %s999 = sadd.s32 1, %s994
                  %p1000 = scmp.ge.s32.totalorder %s999, %s982
                  %s1001 = scalar_select %p1000, 0, %s999
                  %s1002 = smul.u32 %s1001, 8
                  %s1003 = smul.u32 %s1001, 8
                  %s1004 = scalar_lea.vmem %s985, %s1002 [#allocation2]
                  %s1005 = scalar_lea.vmem %s987, %s1003
                $region86: #{block_forward.3} parent=73 // loop_footer
                  %s991 = sadd.s32 %s989, 1
                $region87: #{block_forward.3} parent=73 // loop_footer_branch
                  %988 = sbr.rel target = $region83
                $region88: #{block_forward.3} parent=73 // loop_exit
                  _
              $region74: #{block_forward.3} parent=51 // pred_fallthru
                _
              // Predicated region
              $region89: #{block_forward.3} parent=51 // pred_check
                _
              $region90: #{block_forward.3} parent=51 // pred_check_branch
                %1007 = sbr.rel target = $region92
              $region91: #{block_forward.3} parent=51 // pred_region
                _
              $region92: #{block_forward.3} parent=51 // pred_fallthru
                _
            $region52: #{block_forward.3} parent=47 // pred_fallthru
              _
            // Predicated region
            $region53: #{block_forward.3} parent=47 // pred_check
              _
            $region54: #{block_forward.3} parent=47 // pred_check_branch
              %789 = sbr.rel target = $region56
            $region55: #{block_forward.3} parent=47 // pred_region
              %s791 = ssub.s32 256, 1
              %s792 = sshrl.u32 %s778, 5
              // While loop
              $region57: #{block_forward.3} parent=55 // loop_pre_header
                _
              $region58: #{block_forward.3} parent=55 // loop_header
                %s794 = sphi 0, %s796
                %p795 = scmp.ge.s32.totalorder %s794, %s792
                %s799 = sphi 0, %s868
                %s800 = sphi %s771, %s871
                %s801 = sphi %s782, %s872
              $region59: #{block_forward.3} parent=55 // loop_header_branch
                %798 = sbr.rel (%p795) target = $region63
              $region60: #{block_forward.3} parent=55 // loop_body
                %v802 = vld [vmem:[%s800] sm:%s791]
                %803 = vst [vmem:[%s801] sm:%s791] %v802
                %v804 = vld [vmem:[%s800 + $0x8] sm:%s791]
                %805 = vst [vmem:[%s801 + $0x8] sm:%s791] %v804
                %v806 = vld [vmem:[%s800 + $0x10] sm:%s791]
                %807 = vst [vmem:[%s801 + $0x10] sm:%s791] %v806
                %v808 = vld [vmem:[%s800 + $0x18] sm:%s791]
                %809 = vst [vmem:[%s801 + $0x18] sm:%s791] %v808
                %v810 = vld [vmem:[%s800 + $0x20] sm:%s791]
                %811 = vst [vmem:[%s801 + $0x20] sm:%s791] %v810
                %v812 = vld [vmem:[%s800 + $0x28] sm:%s791]
                %813 = vst [vmem:[%s801 + $0x28] sm:%s791] %v812
                %v814 = vld [vmem:[%s800 + $0x30] sm:%s791]
                %815 = vst [vmem:[%s801 + $0x30] sm:%s791] %v814
                %v816 = vld [vmem:[%s800 + $0x38] sm:%s791]
                %817 = vst [vmem:[%s801 + $0x38] sm:%s791] %v816
                %v818 = vld [vmem:[%s800 + $0x40] sm:%s791]
                %819 = vst [vmem:[%s801 + $0x40] sm:%s791] %v818
                %v820 = vld [vmem:[%s800 + $0x48] sm:%s791]
                %821 = vst [vmem:[%s801 + $0x48] sm:%s791] %v820
                %v822 = vld [vmem:[%s800 + $0x50] sm:%s791]
                %823 = vst [vmem:[%s801 + $0x50] sm:%s791] %v822
                %v824 = vld [vmem:[%s800 + $0x58] sm:%s791]
                %825 = vst [vmem:[%s801 + $0x58] sm:%s791] %v824
                %v826 = vld [vmem:[%s800 + $0x60] sm:%s791]
                %827 = vst [vmem:[%s801 + $0x60] sm:%s791] %v826
                %v828 = vld [vmem:[%s800 + $0x68] sm:%s791]
                %829 = vst [vmem:[%s801 + $0x68] sm:%s791] %v828
                %v830 = vld [vmem:[%s800 + $0x70] sm:%s791]
                %831 = vst [vmem:[%s801 + $0x70] sm:%s791] %v830
                %v832 = vld [vmem:[%s800 + $0x78] sm:%s791]
                %833 = vst [vmem:[%s801 + $0x78] sm:%s791] %v832
                %v834 = vld [vmem:[%s800 + $0x80] sm:%s791]
                %835 = vst [vmem:[%s801 + $0x80] sm:%s791] %v834
                %v836 = vld [vmem:[%s800 + $0x88] sm:%s791]
                %837 = vst [vmem:[%s801 + $0x88] sm:%s791] %v836
                %v838 = vld [vmem:[%s800 + $0x90] sm:%s791]
                %839 = vst [vmem:[%s801 + $0x90] sm:%s791] %v838
                %v840 = vld [vmem:[%s800 + $0x98] sm:%s791]
                %841 = vst [vmem:[%s801 + $0x98] sm:%s791] %v840
                %v842 = vld [vmem:[%s800 + $0xa0] sm:%s791]
                %843 = vst [vmem:[%s801 + $0xa0] sm:%s791] %v842
                %v844 = vld [vmem:[%s800 + $0xa8] sm:%s791]
                %845 = vst [vmem:[%s801 + $0xa8] sm:%s791] %v844
                %v846 = vld [vmem:[%s800 + $0xb0] sm:%s791]
                %847 = vst [vmem:[%s801 + $0xb0] sm:%s791] %v846
                %v848 = vld [vmem:[%s800 + $0xb8] sm:%s791]
                %849 = vst [vmem:[%s801 + $0xb8] sm:%s791] %v848
                %v850 = vld [vmem:[%s800 + $0xc0] sm:%s791]
                %851 = vst [vmem:[%s801 + $0xc0] sm:%s791] %v850
                %v852 = vld [vmem:[%s800 + $0xc8] sm:%s791]
                %853 = vst [vmem:[%s801 + $0xc8] sm:%s791] %v852
                %v854 = vld [vmem:[%s800 + $0xd0] sm:%s791]
                %855 = vst [vmem:[%s801 + $0xd0] sm:%s791] %v854
                %v856 = vld [vmem:[%s800 + $0xd8] sm:%s791]
                %857 = vst [vmem:[%s801 + $0xd8] sm:%s791] %v856
                %v858 = vld [vmem:[%s800 + $0xe0] sm:%s791]
                %859 = vst [vmem:[%s801 + $0xe0] sm:%s791] %v858
                %v860 = vld [vmem:[%s800 + $0xe8] sm:%s791]
                %861 = vst [vmem:[%s801 + $0xe8] sm:%s791] %v860
                %v862 = vld [vmem:[%s800 + $0xf0] sm:%s791]
                %863 = vst [vmem:[%s801 + $0xf0] sm:%s791] %v862
                %v864 = vld [vmem:[%s800 + $0xf8] sm:%s791]
                %865 = vst [vmem:[%s801 + $0xf8] sm:%s791] %v864
                %s866 = sadd.s32 1, %s799
                %p867 = scmp.ge.s32.totalorder %s866, %s792
                %s868 = scalar_select %p867, 0, %s866
                %s869 = smul.u32 %s868, 256
                %s870 = smul.u32 %s868, 256
                %s871 = scalar_lea.vmem %s771, %s869 [#allocation2]
                %s872 = scalar_lea.vmem %s782, %s870
              $region61: #{block_forward.3} parent=55 // loop_footer
                %s796 = sadd.s32 %s794, 1
              $region62: #{block_forward.3} parent=55 // loop_footer_branch
                %793 = sbr.rel target = $region58
              $region63: #{block_forward.3} parent=55 // loop_exit
                _
              %s873 = sshrl.u32 %s778, 5
              %s874 = sand.u32 %s778, 31
              %s875 = smul.u32 %s873, 32
              %s876 = smul.u32 8, %s875
              %s877 = scalar_lea.vmem %s771, %s876 [#allocation2]
              %s878 = smul.u32 8, %s875
              %s879 = scalar_lea.vmem %s782, %s878
              // While loop
              $region64: #{block_forward.3} parent=55 // loop_pre_header
                _
              $region65: #{block_forward.3} parent=55 // loop_header
                %s881 = sphi 0, %s883
                %p882 = scmp.ge.s32.totalorder %s881, %s874
                %s886 = sphi 0, %s893
                %s887 = sphi %s877, %s896
                %s888 = sphi %s879, %s897
              $region66: #{block_forward.3} parent=55 // loop_header_branch
                %885 = sbr.rel (%p882) target = $region70
              $region67: #{block_forward.3} parent=55 // loop_body
                %v889 = vld [vmem:[%s887] sm:%s791]
                %890 = vst [vmem:[%s888] sm:%s791] %v889
                %s891 = sadd.s32 1, %s886
                %p892 = scmp.ge.s32.totalorder %s891, %s874
                %s893 = scalar_select %p892, 0, %s891
                %s894 = smul.u32 %s893, 8
                %s895 = smul.u32 %s893, 8
                %s896 = scalar_lea.vmem %s877, %s894 [#allocation2]
                %s897 = scalar_lea.vmem %s879, %s895
              $region68: #{block_forward.3} parent=55 // loop_footer
                %s883 = sadd.s32 %s881, 1
              $region69: #{block_forward.3} parent=55 // loop_footer_branch
                %880 = sbr.rel target = $region65
              $region70: #{block_forward.3} parent=55 // loop_exit
                _
            $region56: #{block_forward.3} parent=47 // pred_fallthru
              _
          $region48: #{block_forward.3} parent=43 // pred_fallthru
            _
          %1008 = vnop
        $region44: #{block_forward.3} parent=39 // pred_fallthru
          _
      $region40: #{block_forward.3} parent=5 // pred_fallthru
        _
      %p1009 = scmp.le.s32.totalorder 2, %s11
      // Predicated region
      $region93: #{block_forward.3} parent=5 // pred_check
        %p1010 = pneg %p1009
      $region94: #{block_forward.3} parent=5 // pred_check_branch
        %1012 = sbr.rel (%p1010) target = $region96
      $region95: #{block_forward.3} parent=5 // pred_region
        %s1013 = ssub.s32 %s11, 2
        // Predicated region
        $region97: #{block_forward.3} parent=95 // pred_check
          %p1014 = pneg %p150
        $region98: #{block_forward.3} parent=95 // pred_check_branch
          %1016 = sbr.rel (%p1014) target = $region100
        $region99: #{block_forward.3} parent=95 // pred_region
          %s1017 = sand.u32 %s135, 1
          %s1018 = sand.u32 %s135, 1
          %s1019 = smul.addr %s1018, 256
          %s1020 = scalar_lea.vmem [#allocation2], %s1019
        $region100: #{block_forward.3} parent=95 // pred_fallthru
          _
      $region96: #{block_forward.3} parent=5 // pred_fallthru
        _
    $region6: #{block_forward.3} parent=1 // loop_footer
      %s15 = sadd.s32 1, %s11
    $region7: #{block_forward.3} parent=1 // loop_footer_branch
      %10 = sbr.rel target = $region3
    $region8: #{block_forward.3} parent=1 // loop_exit
      _

// kernel: block_forward.2
$region0: #{block_forward.2}
  #allocation0 [shape = 'u32[]', space=smem, size = 0x4, offset = 0x4, fixed_abs, tag = 'smem constant byte address 0x4 - core index']
  #allocation1 [shape = 'u32[72,128]{1,0:T(1,128)}', space=vmem, size = 0x9000, scoped, tag = 'internal scratch']
  %s0 = inlined_call_operand.vmem [shape: f32[2,16,16,128], index: 0, kind: input, shape index: {}]
  %s1 = inlined_call_operand.vmem [shape: f32[9,128], index: 1, kind: input, shape index: {}]
  %s2 = inlined_call_operand.vmem [shape: bf16[2,14,14,128], index: 2, kind: output, shape index: {0}]
  %s3 = inlined_call_operand.vmem [shape: f32[2,2,128], index: 3, kind: output, shape index: {1}]
  %4 = xla_tuple %s2, %s3
  %s5 = sld [smem:[#allocation0]]
  $region49: #{block_forward.2} parent=0
    _
  %s7 = ssub.s32 1, %s5
  %s8 = scalar_select 0, %s7, %s5
  loop: start=0, step=1, limit=4
  $region2: #{block_forward.2} parent=0 // loop_pre_header
    _
  $region3: #{block_forward.2} parent=0 // loop_header
    %s10 = sphi 0, %s14
    %p11 = scmp.ge.s32.totalorder %s10, 4
    %s20 = sphi 0, %s22
    %s23 = sphi 0, %s20
    %s24 = sphi 0, %s23
    %s40 = sphi 0, %s24
    %s44 = sphi 0, %s44
    %s46 = sphi 0, %s44
    %s47 = sphi 0, %s46
    %s61 = sphi 0, %s47
    %s67 = sphi 0, %s69
    %s70 = sphi 0, %s67
    %s71 = sphi 0, %s70
    %s87 = sphi 0, %s71
    %s93 = sphi 0, %s95
    %s96 = sphi 0, %s93
    %s97 = sphi 0, %s96
    %s113 = sphi 0, %s97
  $region4: #{block_forward.2} parent=0 // loop_header_branch
    %13 = sbr.rel (%p11) target = $region8
  $region5: #{block_forward.2} parent=0 // loop_body
    %s15 = ssub.s32 %s10, 1
    %s16 = ssub.s32 %s10, 2
    %s17 = sadd.s32 %s10, 1
    %s18 = ssub.s32 %s10, %s17
    %p19 = scmp.eq.s32.totalorder %s18, 0
    %s21 = sadd.s32 %s20, 1
    %s22 = scalar_select %p19, %s20, %s21
    %p25 = pneg %p19
    %p26 = scmp.eq.s32.totalorder %s10, 1
    %p27 = por %p25, %p26
    %p28 = scmp.ne.s32.totalorder %s20, %s23
    %p29 = scmp.eq.s32.totalorder %s10, 0
    %p30 = por %p28, %p29
    %p31 = scmp.ne.s32.totalorder %s20, %s23
    %p32 = scmp.eq.s32.totalorder %s15, 1
    %p33 = por %p31, %p32
    %p34 = scmp.ne.s32.totalorder %s23, %s24
    %p35 = scmp.eq.s32.totalorder %s15, 0
    %p36 = por %p34, %p35
    %p37 = scmp.ne.s32.totalorder %s23, %s24
    %p38 = scmp.eq.s32.totalorder %s16, 1
    %p39 = por %p37, %p38
    %p41 = scmp.ne.s32.totalorder %s24, %s40
    %p42 = scmp.eq.s32.totalorder %s16, 0
    %p43 = por %p41, %p42
    %s45 = sadd.s32 %s44, 1
    %p48 = scmp.eq.s32.totalorder %s10, 1
    %p49 = scmp.ne.s32.totalorder %s44, %s46
    %p50 = scmp.eq.s32.totalorder %s10, 0
    %p51 = por %p49, %p50
    %p52 = scmp.ne.s32.totalorder %s44, %s46
    %p53 = scmp.eq.s32.totalorder %s15, 1
    %p54 = por %p52, %p53
    %p55 = scmp.ne.s32.totalorder %s46, %s47
    %p56 = scmp.eq.s32.totalorder %s15, 0
    %p57 = por %p55, %p56
    %p58 = scmp.ne.s32.totalorder %s46, %s47
    %p59 = scmp.eq.s32.totalorder %s16, 1
    %p60 = por %p58, %p59
    %p62 = scmp.ne.s32.totalorder %s47, %s61
    %p63 = scmp.eq.s32.totalorder %s16, 0
    %p64 = por %p62, %p63
    %s65 = ssub.s32 %s10, %s17
    %p66 = scmp.eq.s32.totalorder %s65, 0
    %s68 = sadd.s32 %s67, 1
    %s69 = scalar_select %p66, %s67, %s68
    %p72 = pneg %p66
    %p73 = scmp.eq.s32.totalorder %s10, 1
    %p74 = por %p72, %p73
    %p75 = scmp.ne.s32.totalorder %s67, %s70
    %p76 = scmp.eq.s32.totalorder %s10, 0
    %p77 = por %p75, %p76
    %p78 = scmp.ne.s32.totalorder %s67, %s70
    %p79 = scmp.eq.s32.totalorder %s15, 1
    %p80 = por %p78, %p79
    %p81 = scmp.ne.s32.totalorder %s70, %s71
    %p82 = scmp.eq.s32.totalorder %s15, 0
    %p83 = por %p81, %p82
    %p84 = scmp.ne.s32.totalorder %s70, %s71
    %p85 = scmp.eq.s32.totalorder %s16, 1
    %p86 = por %p84, %p85
    %p88 = scmp.ne.s32.totalorder %s71, %s87
    %p89 = scmp.eq.s32.totalorder %s16, 0
    %p90 = por %p88, %p89
    %s91 = ssub.s32 %s10, %s17
    %p92 = scmp.eq.s32.totalorder %s91, 0
    %s94 = sadd.s32 %s93, 1
    %s95 = scalar_select %p92, %s93, %s94
    %p98 = pneg %p92
    %p99 = scmp.eq.s32.totalorder %s10, 1
    %p100 = por %p98, %p99
    %p101 = scmp.ne.s32.totalorder %s93, %s96
    %p102 = scmp.eq.s32.totalorder %s10, 0
    %p103 = por %p101, %p102
    %p104 = scmp.ne.s32.totalorder %s93, %s96
    %p105 = scmp.eq.s32.totalorder %s15, 1
    %p106 = por %p104, %p105
    %p107 = scmp.ne.s32.totalorder %s96, %s97
    %p108 = scmp.eq.s32.totalorder %s15, 0
    %p109 = por %p107, %p108
    %p110 = scmp.ne.s32.totalorder %s96, %s97
    %p111 = scmp.eq.s32.totalorder %s16, 1
    %p112 = por %p110, %p111
    %p114 = scmp.ne.s32.totalorder %s97, %s113
    %p115 = scmp.eq.s32.totalorder %s16, 0
    %p116 = por %p114, %p115
    %p117 = scmp.le.s32.totalorder 1, %s10
    %p118 = scmp.lt.s32.totalorder %s10, 3
    %p119 = pnand %p117, %p118
    %p120 = pneg %p119
    // Predicated region
    $region9: #{block_forward.2} parent=5 // pred_check
      _
    $region10: #{block_forward.2} parent=5 // pred_check_branch
      %122 = sbr.rel (%p119) target = $region12
    $region11: #{block_forward.2} parent=5 // pred_region
      %s123 = ssub.s32 %s10, 1
      // Predicated region
      $region13: #{block_forward.2} parent=11 // pred_check
        %p124 = pneg %p57
      $region14: #{block_forward.2} parent=11 // pred_check_branch
        %126 = sbr.rel (%p124) target = $region16
      $region15: #{block_forward.2} parent=11 // pred_region
        _
      $region16: #{block_forward.2} parent=11 // pred_fallthru
        _
    $region12: #{block_forward.2} parent=5 // pred_fallthru
      _
    %p127 = scmp.lt.s32.totalorder %s10, 2
    // Predicated region
    $region17: #{block_forward.2} parent=5 // pred_check
      %p128 = pneg %p127
    $region18: #{block_forward.2} parent=5 // pred_check_branch
      %130 = sbr.rel (%p128) target = $region20
    $region19: #{block_forward.2} parent=5 // pred_region
      // Predicated region
      $region21: #{block_forward.2} parent=19 // pred_check
        %p131 = pneg %p30
      $region22: #{block_forward.2} parent=19 // pred_check_branch
        %133 = sbr.rel (%p131) target = $region24
      $region23: #{block_forward.2} parent=19 // pred_region
        %p134 = scmp.lt.s32.totalorder %s10, 1
        %s135 = scalar_select %p134, %s10, 1
        %s136 = smul.addr %s135, 32
        %s137 = smul.addr %s136, 8
        %s138 = scalar_lea.vmem %s0, %s137
      $region24: #{block_forward.2} parent=19 // pred_fallthru
        _
    $region20: #{block_forward.2} parent=5 // pred_fallthru
      _
    %p139 = scmp.le.s32.totalorder 1, %s10
    %p140 = scmp.lt.s32.totalorder %s10, 3
    %p141 = pnand %p139, %p140
    %p142 = pneg %p141
    // Predicated region
    $region25: #{block_forward.2} parent=5 // pred_check
      _
    $region26: #{block_forward.2} parent=5 // pred_check_branch
      %144 = sbr.rel (%p141) target = $region28
    $region27: #{block_forward.2} parent=5 // pred_region
      %s145 = ssub.s32 %s10, 1
      %p146 = scmp.lt.s32.totalorder %s15, 1
      %s147 = scalar_select %p146, %s15, 1
      %s148 = smul.addr %s147, 32
      %s149 = smul.addr %s148, 8
      %s150 = scalar_lea.vmem %s0, %s149
      %p151 = pneg %p36
      %p152 = pneg %p33
      %p153 = pneg %p57
      %p154 = pneg %p54
      %p155 = pneg %p83
      %p156 = pneg %p80
      %p157 = scmp.lt.s32.totalorder %s15, 1
      %s158 = scalar_select %p157, %s15, 1
      %s159 = smul.addr %s158, 28
      %s160 = smul.addr %s159, 4
      %s161 = scalar_lea.vmem %s2, %s160
      %p162 = pneg %p109
      %p163 = pneg %p106
      %p164 = scmp.lt.s32.totalorder %s15, 1
      %s165 = scalar_select %p164, %s15, 1
      %s166 = smul.addr %s165, 2
      %s167 = scalar_lea.vmem %s3, %s166
      %p168 = scmp.lt.s32.totalorder %s15, 1
      %s169 = scalar_select %p168, %s15, 1
      %s170 = smul.addr %s169, 32
      %s171 = smul.addr %s170, 8
      %s172 = scalar_lea.vmem %s0, %s171
      %p173 = scmp.lt.s32.totalorder %s15, 1
      %s174 = scalar_select %p173, %s15, 1
      %s175 = smul.addr %s174, 28
      %s176 = smul.addr %s175, 4
      %s177 = scalar_lea.vmem %s2, %s176
      %p178 = scmp.lt.s32.totalorder %s15, 1
      %s179 = scalar_select %p178, %s15, 1
      %s180 = smul.addr %s179, 2
      %s181 = scalar_lea.vmem %s3, %s180
      %v182 = vld [vmem:[%s172] sm:$0xff]
      %v183 = vld [vmem:[%s172 + $0x8] sm:$0x3f]
      %v184 = vld [vmem:[%s172 + $0x10] sm:$0xff]
      %v185 = vld [vmem:[%s172 + $0x18] sm:$0x3f]
      %v186 = vld [vmem:[%s172 + $0x20] sm:$0xff]
      %v187 = vld [vmem:[%s172 + $0x28] sm:$0x3f]
      %v188 = vld [vmem:[%s172 + $0x30] sm:$0xff]
      %v189 = vld [vmem:[%s172 + $0x38] sm:$0x3f]
      %v190 = vld [vmem:[%s172 + $0x40] sm:$0xff]
      %v191 = vld [vmem:[%s172 + $0x48] sm:$0x3f]
      %v192 = vld [vmem:[%s172 + $0x50] sm:$0xff]
      %v193 = vld [vmem:[%s172 + $0x58] sm:$0x3f]
      %v194 = vld [vmem:[%s172 + $0x60] sm:$0xff]
      %v195 = vld [vmem:[%s172 + $0x68] sm:$0x3f]
      %v196 = vld [vmem:[%s172 + $0x70] sm:$0xff]
      %v197 = vld [vmem:[%s172 + $0x78] sm:$0x3f]
      %v198 = vld [vmem:[%s172 + $0x80] sm:$0xff]
      %v199 = vld [vmem:[%s172 + $0x88] sm:$0x3f]
      %v200 = vld [vmem:[%s172 + $0x90] sm:$0xff]
      %v201 = vld [vmem:[%s172 + $0x98] sm:$0x3f]
      %v202 = vld [vmem:[%s172 + $0xa0] sm:$0xff]
      %v203 = vld [vmem:[%s172 + $0xa8] sm:$0x3f]
      %v204 = vld [vmem:[%s172 + $0xb0] sm:$0xff]
      %v205 = vld [vmem:[%s172 + $0xb8] sm:$0x3f]
      %v206 = vld [vmem:[%s172 + $0xc0] sm:$0xff]
      %v207 = vld [vmem:[%s172 + $0xc8] sm:$0x3f]
      %v208 = vld [vmem:[%s172 + $0xd0] sm:$0xff]
      %v209 = vld [vmem:[%s172 + $0xd8] sm:$0x3f]
      %v210 = vld [vmem:[%s1] sm:$0x1]
      %v211 = vperm.slane %v210, 0
      %v212 = vmul.f32 %v182, %v211
      %v213 = vmul.f32 %v183, %v211
      %v214 = vmul.f32 %v184, %v211
      %v215 = vmul.f32 %v185, %v211
      %v216 = vmul.f32 %v186, %v211
      %v217 = vmul.f32 %v187, %v211
      %v218 = vmul.f32 %v188, %v211
      %v219 = vmul.f32 %v189, %v211
      %v220 = vmul.f32 %v190, %v211
      %v221 = vmul.f32 %v191, %v211
      %v222 = vmul.f32 %v192, %v211
      %v223 = vmul.f32 %v193, %v211
      %v224 = vmul.f32 %v194, %v211
      %v225 = vmul.f32 %v195, %v211
      %v226 = vmul.f32 %v196, %v211
      %v227 = vmul.f32 %v197, %v211
      %v228 = vmul.f32 %v198, %v211
      %v229 = vmul.f32 %v199, %v211
      %v230 = vmul.f32 %v200, %v211
      %v231 = vmul.f32 %v201, %v211
      %v232 = vmul.f32 %v202, %v211
      %v233 = vmul.f32 %v203, %v211
      %v234 = vmul.f32 %v204, %v211
      %v235 = vmul.f32 %v205, %v211
      %v236 = vmul.f32 %v206, %v211
      %v237 = vmul.f32 %v207, %v211
      %v238 = vmul.f32 %v208, %v211
      %v239 = vmul.f32 %v209, %v211
      %v240 = vadd.f32 %v212, 0.0
      %v241 = vadd.f32 %v213, 0.0
      %v242 = vadd.f32 %v214, 0.0
      %v243 = vadd.f32 %v215, 0.0
      %v244 = vadd.f32 %v216, 0.0
      %v245 = vadd.f32 %v217, 0.0
      %v246 = vadd.f32 %v218, 0.0
      %v247 = vadd.f32 %v219, 0.0
      %v248 = vadd.f32 %v220, 0.0
      %v249 = vadd.f32 %v221, 0.0
      %v250 = vadd.f32 %v222, 0.0
      %v251 = vadd.f32 %v223, 0.0
      %v252 = vadd.f32 %v224, 0.0
      %v253 = vadd.f32 %v225, 0.0
      %v254 = vadd.f32 %v226, 0.0
      %v255 = vadd.f32 %v227, 0.0
      %v256 = vadd.f32 %v228, 0.0
      %v257 = vadd.f32 %v229, 0.0
      %v258 = vadd.f32 %v230, 0.0
      %v259 = vadd.f32 %v231, 0.0
      %v260 = vadd.f32 %v232, 0.0
      %v261 = vadd.f32 %v233, 0.0
      %v262 = vadd.f32 %v234, 0.0
      %v263 = vadd.f32 %v235, 0.0
      %v264 = vadd.f32 %v236, 0.0
      %v265 = vadd.f32 %v237, 0.0
      %v266 = vadd.f32 %v238, 0.0
      %v267 = vadd.f32 %v239, 0.0
      %v268 = vld [vmem:[%s172 + $0x1] sm:$0xff]
      %v269 = vld [vmem:[%s172 + $0x9] sm:$0x3f]
      %v270 = vld [vmem:[%s172 + $0x11] sm:$0xff]
      %v271 = vld [vmem:[%s172 + $0x19] sm:$0x3f]
      %v272 = vld [vmem:[%s172 + $0x21] sm:$0xff]
      %v273 = vld [vmem:[%s172 + $0x29] sm:$0x3f]
      %v274 = vld [vmem:[%s172 + $0x31] sm:$0xff]
      %v275 = vld [vmem:[%s172 + $0x39] sm:$0x3f]
      %v276 = vld [vmem:[%s172 + $0x41] sm:$0xff]
      %v277 = vld [vmem:[%s172 + $0x49] sm:$0x3f]
      %v278 = vld [vmem:[%s172 + $0x51] sm:$0xff]
      %v279 = vld [vmem:[%s172 + $0x59] sm:$0x3f]
      %v280 = vld [vmem:[%s172 + $0x61] sm:$0xff]
      %v281 = vld [vmem:[%s172 + $0x69] sm:$0x3f]
      %v282 = vld [vmem:[%s172 + $0x71] sm:$0xff]
      %v283 = vld [vmem:[%s172 + $0x79] sm:$0x3f]
      %v284 = vld [vmem:[%s172 + $0x81] sm:$0xff]
      %v285 = vld [vmem:[%s172 + $0x89] sm:$0x3f]
      %v286 = vld [vmem:[%s172 + $0x91] sm:$0xff]
      %v287 = vld [vmem:[%s172 + $0x99] sm:$0x3f]
      %v288 = vld [vmem:[%s172 + $0xa1] sm:$0xff]
      %v289 = vld [vmem:[%s172 + $0xa9] sm:$0x3f]
      %v290 = vld [vmem:[%s172 + $0xb1] sm:$0xff]
      %v291 = vld [vmem:[%s172 + $0xb9] sm:$0x3f]
      %v292 = vld [vmem:[%s172 + $0xc1] sm:$0xff]
      %v293 = vld [vmem:[%s172 + $0xc9] sm:$0x3f]
      %v294 = vld [vmem:[%s172 + $0xd1] sm:$0xff]
      %v295 = vld [vmem:[%s172 + $0xd9] sm:$0x3f]
      %v296 = vld [vmem:[%s1 + $0x1] sm:$0x1]
      %v297 = vperm.slane %v296, 0
      %v298 = vmul.f32 %v268, %v297
      %v299 = vmul.f32 %v269, %v297
      %v300 = vmul.f32 %v270, %v297
      %v301 = vmul.f32 %v271, %v297
      %v302 = vmul.f32 %v272, %v297
      %v303 = vmul.f32 %v273, %v297
      %v304 = vmul.f32 %v274, %v297
      %v305 = vmul.f32 %v275, %v297
      %v306 = vmul.f32 %v276, %v297
      %v307 = vmul.f32 %v277, %v297
      %v308 = vmul.f32 %v278, %v297
      %v309 = vmul.f32 %v279, %v297
      %v310 = vmul.f32 %v280, %v297
      %v311 = vmul.f32 %v281, %v297
      %v312 = vmul.f32 %v282, %v297
      %v313 = vmul.f32 %v283, %v297
      %v314 = vmul.f32 %v284, %v297
      %v315 = vmul.f32 %v285, %v297
      %v316 = vmul.f32 %v286, %v297
      %v317 = vmul.f32 %v287, %v297
      %v318 = vmul.f32 %v288, %v297
      %v319 = vmul.f32 %v289, %v297
      %v320 = vmul.f32 %v290, %v297
      %v321 = vmul.f32 %v291, %v297
      %v322 = vmul.f32 %v292, %v297
      %v323 = vmul.f32 %v293, %v297
      %v324 = vmul.f32 %v294, %v297
      %v325 = vmul.f32 %v295, %v297
      %v326 = vadd.f32 %v240, %v298
      %v327 = vadd.f32 %v241, %v299
      %v328 = vadd.f32 %v242, %v300
      %v329 = vadd.f32 %v243, %v301
      %v330 = vadd.f32 %v244, %v302
      %v331 = vadd.f32 %v245, %v303
      %v332 = vadd.f32 %v246, %v304
      %v333 = vadd.f32 %v247, %v305
      %v334 = vadd.f32 %v248, %v306
      %v335 = vadd.f32 %v249, %v307
      %v336 = vadd.f32 %v250, %v308
      %v337 = vadd.f32 %v251, %v309
      %v338 = vadd.f32 %v252, %v310
      %v339 = vadd.f32 %v253, %v311
      %v340 = vadd.f32 %v254, %v312
      %v341 = vadd.f32 %v255, %v313
      %v342 = vadd.f32 %v256, %v314
      %v343 = vadd.f32 %v257, %v315
      %v344 = vadd.f32 %v258, %v316
      %v345 = vadd.f32 %v259, %v317
      %v346 = vadd.f32 %v260, %v318
      %v347 = vadd.f32 %v261, %v319
      %v348 = vadd.f32 %v262, %v320
      %v349 = vadd.f32 %v263, %v321
      %v350 = vadd.f32 %v264, %v322
      %v351 = vadd.f32 %v265, %v323
      %v352 = vadd.f32 %v266, %v324
      %v353 = vadd.f32 %v267, %v325
      %v354 = vld [vmem:[%s172 + $0x2] sm:$0xff]
      %v355 = vld [vmem:[%s172 + $0xa] sm:$0x3f]
      %v356 = vld [vmem:[%s172 + $0x12] sm:$0xff]
      %v357 = vld [vmem:[%s172 + $0x1a] sm:$0x3f]
      %v358 = vld [vmem:[%s172 + $0x22] sm:$0xff]
      %v359 = vld [vmem:[%s172 + $0x2a] sm:$0x3f]
      %v360 = vld [vmem:[%s172 + $0x32] sm:$0xff]
      %v361 = vld [vmem:[%s172 + $0x3a] sm:$0x3f]
      %v362 = vld [vmem:[%s172 + $0x42] sm:$0xff]
      %v363 = vld [vmem:[%s172 + $0x4a] sm:$0x3f]
      %v364 = vld [vmem:[%s172 + $0x52] sm:$0xff]
      %v365 = vld [vmem:[%s172 + $0x5a] sm:$0x3f]
      %v366 = vld [vmem:[%s172 + $0x62] sm:$0xff]
      %v367 = vld [vmem:[%s172 + $0x6a] sm:$0x3f]
      %v368 = vld [vmem:[%s172 + $0x72] sm:$0xff]
      %v369 = vld [vmem:[%s172 + $0x7a] sm:$0x3f]
      %v370 = vld [vmem:[%s172 + $0x82] sm:$0xff]
      %v371 = vld [vmem:[%s172 + $0x8a] sm:$0x3f]
      %v372 = vld [vmem:[%s172 + $0x92] sm:$0xff]
      %v373 = vld [vmem:[%s172 + $0x9a] sm:$0x3f]
      %v374 = vld [vmem:[%s172 + $0xa2] sm:$0xff]
      %v375 = vld [vmem:[%s172 + $0xaa] sm:$0x3f]
      %v376 = vld [vmem:[%s172 + $0xb2] sm:$0xff]
      %v377 = vld [vmem:[%s172 + $0xba] sm:$0x3f]
      %v378 = vld [vmem:[%s172 + $0xc2] sm:$0xff]
      %v379 = vld [vmem:[%s172 + $0xca] sm:$0x3f]
      %v380 = vld [vmem:[%s172 + $0xd2] sm:$0xff]
      %v381 = vld [vmem:[%s172 + $0xda] sm:$0x3f]
      %v382 = vld [vmem:[%s1 + $0x2] sm:$0x1]
      %v383 = vperm.slane %v382, 0
      %v384 = vmul.f32 %v354, %v383
      %v385 = vmul.f32 %v355, %v383
      %v386 = vmul.f32 %v356, %v383
      %v387 = vmul.f32 %v357, %v383
      %v388 = vmul.f32 %v358, %v383
      %v389 = vmul.f32 %v359, %v383
      %v390 = vmul.f32 %v360, %v383
      %v391 = vmul.f32 %v361, %v383
      %v392 = vmul.f32 %v362, %v383
      %v393 = vmul.f32 %v363, %v383
      %v394 = vmul.f32 %v364, %v383
      %v395 = vmul.f32 %v365, %v383
      %v396 = vmul.f32 %v366, %v383
      %v397 = vmul.f32 %v367, %v383
      %v398 = vmul.f32 %v368, %v383
      %v399 = vmul.f32 %v369, %v383
      %v400 = vmul.f32 %v370, %v383
      %v401 = vmul.f32 %v371, %v383
      %v402 = vmul.f32 %v372, %v383
      %v403 = vmul.f32 %v373, %v383
      %v404 = vmul.f32 %v374, %v383
      %v405 = vmul.f32 %v375, %v383
      %v406 = vmul.f32 %v376, %v383
      %v407 = vmul.f32 %v377, %v383
      %v408 = vmul.f32 %v378, %v383
      %v409 = vmul.f32 %v379, %v383
      %v410 = vmul.f32 %v380, %v383
      %v411 = vmul.f32 %v381, %v383
      %v412 = vadd.f32 %v326, %v384
      %v413 = vadd.f32 %v327, %v385
      %v414 = vadd.f32 %v328, %v386
      %v415 = vadd.f32 %v329, %v387
      %v416 = vadd.f32 %v330, %v388
      %v417 = vadd.f32 %v331, %v389
      %v418 = vadd.f32 %v332, %v390
      %v419 = vadd.f32 %v333, %v391
      %v420 = vadd.f32 %v334, %v392
      %v421 = vadd.f32 %v335, %v393
      %v422 = vadd.f32 %v336, %v394
      %v423 = vadd.f32 %v337, %v395
      %v424 = vadd.f32 %v338, %v396
      %v425 = vadd.f32 %v339, %v397
      %v426 = vadd.f32 %v340, %v398
      %v427 = vadd.f32 %v341, %v399
      %v428 = vadd.f32 %v342, %v400
      %v429 = vadd.f32 %v343, %v401
      %v430 = vadd.f32 %v344, %v402
      %v431 = vadd.f32 %v345, %v403
      %v432 = vadd.f32 %v346, %v404
      %v433 = vadd.f32 %v347, %v405
      %v434 = vadd.f32 %v348, %v406
      %v435 = vadd.f32 %v349, %v407
      %v436 = vadd.f32 %v350, %v408
      %v437 = vadd.f32 %v351, %v409
      %v438 = vadd.f32 %v352, %v410
      %v439 = vadd.f32 %v353, %v411
      %s440 = scalar_lea.vmem %s172, 16
      %v441 = vld [vmem:[%s440] sm:$0xff]
      %v442 = vld [vmem:[%s440 + $0x8] sm:$0x3f]
      %v443 = vld [vmem:[%s440 + $0x10] sm:$0xff]
      %v444 = vld [vmem:[%s440 + $0x18] sm:$0x3f]
      %v445 = vld [vmem:[%s440 + $0x20] sm:$0xff]
      %v446 = vld [vmem:[%s440 + $0x28] sm:$0x3f]
      %v447 = vld [vmem:[%s440 + $0x30] sm:$0xff]
      %v448 = vld [vmem:[%s440 + $0x38] sm:$0x3f]
      %v449 = vld [vmem:[%s440 + $0x40] sm:$0xff]
      %v450 = vld [vmem:[%s440 + $0x48] sm:$0x3f]
      %v451 = vld [vmem:[%s440 + $0x50] sm:$0xff]
      %v452 = vld [vmem:[%s440 + $0x58] sm:$0x3f]
      %v453 = vld [vmem:[%s440 + $0x60] sm:$0xff]
      %v454 = vld [vmem:[%s440 + $0x68] sm:$0x3f]
      %v455 = vld [vmem:[%s440 + $0x70] sm:$0xff]
      %v456 = vld [vmem:[%s440 + $0x78] sm:$0x3f]
      %v457 = vld [vmem:[%s440 + $0x80] sm:$0xff]
      %v458 = vld [vmem:[%s440 + $0x88] sm:$0x3f]
      %v459 = vld [vmem:[%s440 + $0x90] sm:$0xff]
      %v460 = vld [vmem:[%s440 + $0x98] sm:$0x3f]
      %v461 = vld [vmem:[%s440 + $0xa0] sm:$0xff]
      %v462 = vld [vmem:[%s440 + $0xa8] sm:$0x3f]
      %v463 = vld [vmem:[%s440 + $0xb0] sm:$0xff]
      %v464 = vld [vmem:[%s440 + $0xb8] sm:$0x3f]
      %v465 = vld [vmem:[%s440 + $0xc0] sm:$0xff]
      %v466 = vld [vmem:[%s440 + $0xc8] sm:$0x3f]
      %v467 = vld [vmem:[%s440 + $0xd0] sm:$0xff]
      %v468 = vld [vmem:[%s440 + $0xd8] sm:$0x3f]
      %v469 = vld [vmem:[%s1 + $0x3] sm:$0x1]
      %v470 = vperm.slane %v469, 0
      %v471 = vmul.f32 %v441, %v470
      %v472 = vmul.f32 %v442, %v470
      %v473 = vmul.f32 %v443, %v470
      %v474 = vmul.f32 %v444, %v470
      %v475 = vmul.f32 %v445, %v470
      %v476 = vmul.f32 %v446, %v470
      %v477 = vmul.f32 %v447, %v470
      %v478 = vmul.f32 %v448, %v470
      %v479 = vmul.f32 %v449, %v470
      %v480 = vmul.f32 %v450, %v470
      %v481 = vmul.f32 %v451, %v470
      %v482 = vmul.f32 %v452, %v470
      %v483 = vmul.f32 %v453, %v470
      %v484 = vmul.f32 %v454, %v470
      %v485 = vmul.f32 %v455, %v470
      %v486 = vmul.f32 %v456, %v470
      %v487 = vmul.f32 %v457, %v470
      %v488 = vmul.f32 %v458, %v470
      %v489 = vmul.f32 %v459, %v470
      %v490 = vmul.f32 %v460, %v470
      %v491 = vmul.f32 %v461, %v470
      %v492 = vmul.f32 %v462, %v470
      %v493 = vmul.f32 %v463, %v470
      %v494 = vmul.f32 %v464, %v470
      %v495 = vmul.f32 %v465, %v470
      %v496 = vmul.f32 %v466, %v470
      %v497 = vmul.f32 %v467, %v470
      %v498 = vmul.f32 %v468, %v470
      %v499 = vadd.f32 %v412, %v471
      %v500 = vadd.f32 %v413, %v472
      %v501 = vadd.f32 %v414, %v473
      %v502 = vadd.f32 %v415, %v474
      %v503 = vadd.f32 %v416, %v475
      %v504 = vadd.f32 %v417, %v476
      %v505 = vadd.f32 %v418, %v477
      %v506 = vadd.f32 %v419, %v478
      %v507 = vadd.f32 %v420, %v479
      %v508 = vadd.f32 %v421, %v480
      %v509 = vadd.f32 %v422, %v481
      %v510 = vadd.f32 %v423, %v482
      %v511 = vadd.f32 %v424, %v483
      %v512 = vadd.f32 %v425, %v484
      %v513 = vadd.f32 %v426, %v485
      %v514 = vadd.f32 %v427, %v486
      %v515 = vadd.f32 %v428, %v487
      %v516 = vadd.f32 %v429, %v488
      %v517 = vadd.f32 %v430, %v489
      %v518 = vadd.f32 %v431, %v490
      %v519 = vadd.f32 %v432, %v491
      %v520 = vadd.f32 %v433, %v492
      %v521 = vadd.f32 %v434, %v493
      %v522 = vadd.f32 %v435, %v494
      %v523 = vadd.f32 %v436, %v495
      %v524 = vadd.f32 %v437, %v496
      %v525 = vadd.f32 %v438, %v497
      %v526 = vadd.f32 %v439, %v498
      %v527 = vld [vmem:[%s440 + $0x1] sm:$0xff]
      %v528 = vld [vmem:[%s440 + $0x9] sm:$0x3f]
      %v529 = vld [vmem:[%s440 + $0x11] sm:$0xff]
      %v530 = vld [vmem:[%s440 + $0x19] sm:$0x3f]
      %v531 = vld [vmem:[%s440 + $0x21] sm:$0xff]
      %v532 = vld [vmem:[%s440 + $0x29] sm:$0x3f]
      %v533 = vld [vmem:[%s440 + $0x31] sm:$0xff]
      %v534 = vld [vmem:[%s440 + $0x39] sm:$0x3f]
      %v535 = vld [vmem:[%s440 + $0x41] sm:$0xff]
      %v536 = vld [vmem:[%s440 + $0x49] sm:$0x3f]
      %v537 = vld [vmem:[%s440 + $0x51] sm:$0xff]
      %v538 = vld [vmem:[%s440 + $0x59] sm:$0x3f]
      %v539 = vld [vmem:[%s440 + $0x61] sm:$0xff]
      %v540 = vld [vmem:[%s440 + $0x69] sm:$0x3f]
      %v541 = vld [vmem:[%s440 + $0x71] sm:$0xff]
      %v542 = vld [vmem:[%s440 + $0x79] sm:$0x3f]
      %v543 = vld [vmem:[%s440 + $0x81] sm:$0xff]
      %v544 = vld [vmem:[%s440 + $0x89] sm:$0x3f]
      %v545 = vld [vmem:[%s440 + $0x91] sm:$0xff]
      %v546 = vld [vmem:[%s440 + $0x99] sm:$0x3f]
      %v547 = vld [vmem:[%s440 + $0xa1] sm:$0xff]
      %v548 = vld [vmem:[%s440 + $0xa9] sm:$0x3f]
      %v549 = vld [vmem:[%s440 + $0xb1] sm:$0xff]
      %v550 = vld [vmem:[%s440 + $0xb9] sm:$0x3f]
      %v551 = vld [vmem:[%s440 + $0xc1] sm:$0xff]
      %v552 = vld [vmem:[%s440 + $0xc9] sm:$0x3f]
      %v553 = vld [vmem:[%s440 + $0xd1] sm:$0xff]
      %v554 = vld [vmem:[%s440 + $0xd9] sm:$0x3f]
      %v555 = vld [vmem:[%s1 + $0x4] sm:$0x1]
      %v556 = vperm.slane %v555, 0
      %v557 = vmul.f32 %v527, %v556
      %v558 = vmul.f32 %v528, %v556
      %v559 = vmul.f32 %v529, %v556
      %v560 = vmul.f32 %v530, %v556
      %v561 = vmul.f32 %v531, %v556
      %v562 = vmul.f32 %v532, %v556
      %v563 = vmul.f32 %v533, %v556
      %v564 = vmul.f32 %v534, %v556
      %v565 = vmul.f32 %v535, %v556
      %v566 = vmul.f32 %v536, %v556
      %v567 = vmul.f32 %v537, %v556
      %v568 = vmul.f32 %v538, %v556
      %v569 = vmul.f32 %v539, %v556
      %v570 = vmul.f32 %v540, %v556
      %v571 = vmul.f32 %v541, %v556
      %v572 = vmul.f32 %v542, %v556
      %v573 = vmul.f32 %v543, %v556
      %v574 = vmul.f32 %v544, %v556
      %v575 = vmul.f32 %v545, %v556
      %v576 = vmul.f32 %v546, %v556
      %v577 = vmul.f32 %v547, %v556
      %v578 = vmul.f32 %v548, %v556
      %v579 = vmul.f32 %v549, %v556
      %v580 = vmul.f32 %v550, %v556
      %v581 = vmul.f32 %v551, %v556
      %v582 = vmul.f32 %v552, %v556
      %v583 = vmul.f32 %v553, %v556
      %v584 = vmul.f32 %v554, %v556
      %v585 = vadd.f32 %v499, %v557
      %v586 = vadd.f32 %v500, %v558
      %v587 = vadd.f32 %v501, %v559
      %v588 = vadd.f32 %v502, %v560
      %v589 = vadd.f32 %v503, %v561
      %v590 = vadd.f32 %v504, %v562
      %v591 = vadd.f32 %v505, %v563
      %v592 = vadd.f32 %v506, %v564
      %v593 = vadd.f32 %v507, %v565
      %v594 = vadd.f32 %v508, %v566
      %v595 = vadd.f32 %v509, %v567
      %v596 = vadd.f32 %v510, %v568
      %v597 = vadd.f32 %v511, %v569
      %v598 = vadd.f32 %v512, %v570
      %v599 = vadd.f32 %v513, %v571
      %v600 = vadd.f32 %v514, %v572
      %v601 = vadd.f32 %v515, %v573
      %v602 = vadd.f32 %v516, %v574
      %v603 = vadd.f32 %v517, %v575
      %v604 = vadd.f32 %v518, %v576
      %v605 = vadd.f32 %v519, %v577
      %v606 = vadd.f32 %v520, %v578
      %v607 = vadd.f32 %v521, %v579
      %v608 = vadd.f32 %v522, %v580
      %v609 = vadd.f32 %v523, %v581
      %v610 = vadd.f32 %v524, %v582
      %v611 = vadd.f32 %v525, %v583
      %v612 = vadd.f32 %v526, %v584
      %v613 = vld [vmem:[%s440 + $0x2] sm:$0xff]
      %v614 = vld [vmem:[%s440 + $0xa] sm:$0x3f]
      %v615 = vld [vmem:[%s440 + $0x12] sm:$0xff]
      %v616 = vld [vmem:[%s440 + $0x1a] sm:$0x3f]
      %v617 = vld [vmem:[%s440 + $0x22] sm:$0xff]
      %v618 = vld [vmem:[%s440 + $0x2a] sm:$0x3f]
      %v619 = vld [vmem:[%s440 + $0x32] sm:$0xff]
      %v620 = vld [vmem:[%s440 + $0x3a] sm:$0x3f]
      %v621 = vld [vmem:[%s440 + $0x42] sm:$0xff]
      %v622 = vld [vmem:[%s440 + $0x4a] sm:$0x3f]
      %v623 = vld [vmem:[%s440 + $0x52] sm:$0xff]
      %v624 = vld [vmem:[%s440 + $0x5a] sm:$0x3f]
      %v625 = vld [vmem:[%s440 + $0x62] sm:$0xff]
      %v626 = vld [vmem:[%s440 + $0x6a] sm:$0x3f]
      %v627 = vld [vmem:[%s440 + $0x72] sm:$0xff]
      %v628 = vld [vmem:[%s440 + $0x7a] sm:$0x3f]
      %v629 = vld [vmem:[%s440 + $0x82] sm:$0xff]
      %v630 = vld [vmem:[%s440 + $0x8a] sm:$0x3f]
      %v631 = vld [vmem:[%s440 + $0x92] sm:$0xff]
      %v632 = vld [vmem:[%s440 + $0x9a] sm:$0x3f]
      %v633 = vld [vmem:[%s440 + $0xa2] sm:$0xff]
      %v634 = vld [vmem:[%s440 + $0xaa] sm:$0x3f]
      %v635 = vld [vmem:[%s440 + $0xb2] sm:$0xff]
      %v636 = vld [vmem:[%s440 + $0xba] sm:$0x3f]
      %v637 = vld [vmem:[%s440 + $0xc2] sm:$0xff]
      %v638 = vld [vmem:[%s440 + $0xca] sm:$0x3f]
      %v639 = vld [vmem:[%s440 + $0xd2] sm:$0xff]
      %v640 = vld [vmem:[%s440 + $0xda] sm:$0x3f]
      %v641 = vld [vmem:[%s1 + $0x5] sm:$0x1]
      %v642 = vperm.slane %v641, 0
      %v643 = vmul.f32 %v613, %v642
      %v644 = vmul.f32 %v614, %v642
      %v645 = vmul.f32 %v615, %v642
      %v646 = vmul.f32 %v616, %v642
      %v647 = vmul.f32 %v617, %v642
      %v648 = vmul.f32 %v618, %v642
      %v649 = vmul.f32 %v619, %v642
      %v650 = vmul.f32 %v620, %v642
      %v651 = vmul.f32 %v621, %v642
      %v652 = vmul.f32 %v622, %v642
      %v653 = vmul.f32 %v623, %v642
      %v654 = vmul.f32 %v624, %v642
      %v655 = vmul.f32 %v625, %v642
      %v656 = vmul.f32 %v626, %v642
      %v657 = vmul.f32 %v627, %v642
      %v658 = vmul.f32 %v628, %v642
      %v659 = vmul.f32 %v629, %v642
      %v660 = vmul.f32 %v630, %v642
      %v661 = vmul.f32 %v631, %v642
      %v662 = vmul.f32 %v632, %v642
      %v663 = vmul.f32 %v633, %v642
      %v664 = vmul.f32 %v634, %v642
      %v665 = vmul.f32 %v635, %v642
      %v666 = vmul.f32 %v636, %v642
      %v667 = vmul.f32 %v637, %v642
      %v668 = vmul.f32 %v638, %v642
      %v669 = vmul.f32 %v639, %v642
      %v670 = vmul.f32 %v640, %v642
      %v671 = vadd.f32 %v585, %v643
      %v672 = vadd.f32 %v586, %v644
      %v673 = vadd.f32 %v587, %v645
      %v674 = vadd.f32 %v588, %v646
      %v675 = vadd.f32 %v589, %v647
      %v676 = vadd.f32 %v590, %v648
      %v677 = vadd.f32 %v591, %v649
      %v678 = vadd.f32 %v592, %v650
      %v679 = vadd.f32 %v593, %v651
      %v680 = vadd.f32 %v594, %v652
      %v681 = vadd.f32 %v595, %v653
      %v682 = vadd.f32 %v596, %v654
      %v683 = vadd.f32 %v597, %v655
      %v684 = vadd.f32 %v598, %v656
      %v685 = vadd.f32 %v599, %v657
      %v686 = vadd.f32 %v600, %v658
      %v687 = vadd.f32 %v601, %v659
      %v688 = vadd.f32 %v602, %v660
      %v689 = vadd.f32 %v603, %v661
      %v690 = vadd.f32 %v604, %v662
      %v691 = vadd.f32 %v605, %v663
      %v692 = vadd.f32 %v606, %v664
      %v693 = vadd.f32 %v607, %v665
      %v694 = vadd.f32 %v608, %v666
      %v695 = vadd.f32 %v609, %v667
      %v696 = vadd.f32 %v610, %v668
      %v697 = vadd.f32 %v611, %v669
      %v698 = vadd.f32 %v612, %v670
      %s699 = scalar_lea.vmem %s172, 32
      %v700 = vld [vmem:[%s699] sm:$0xff]
      %v701 = vld [vmem:[%s699 + $0x8] sm:$0x3f]
      %v702 = vld [vmem:[%s699 + $0x10] sm:$0xff]
      %v703 = vld [vmem:[%s699 + $0x18] sm:$0x3f]
      %v704 = vld [vmem:[%s699 + $0x20] sm:$0xff]
      %v705 = vld [vmem:[%s699 + $0x28] sm:$0x3f]
      %v706 = vld [vmem:[%s699 + $0x30] sm:$0xff]
      %v707 = vld [vmem:[%s699 + $0x38] sm:$0x3f]
      %v708 = vld [vmem:[%s699 + $0x40] sm:$0xff]
      %v709 = vld [vmem:[%s699 + $0x48] sm:$0x3f]
      %v710 = vld [vmem:[%s699 + $0x50] sm:$0xff]
      %v711 = vld [vmem:[%s699 + $0x58] sm:$0x3f]
      %v712 = vld [vmem:[%s699 + $0x60] sm:$0xff]
      %v713 = vld [vmem:[%s699 + $0x68] sm:$0x3f]
      %v714 = vld [vmem:[%s699 + $0x70] sm:$0xff]
      %v715 = vld [vmem:[%s699 + $0x78] sm:$0x3f]
      %v716 = vld [vmem:[%s699 + $0x80] sm:$0xff]
      %v717 = vld [vmem:[%s699 + $0x88] sm:$0x3f]
      %v718 = vld [vmem:[%s699 + $0x90] sm:$0xff]
      %v719 = vld [vmem:[%s699 + $0x98] sm:$0x3f]
      %v720 = vld [vmem:[%s699 + $0xa0] sm:$0xff]
      %v721 = vld [vmem:[%s699 + $0xa8] sm:$0x3f]
      %v722 = vld [vmem:[%s699 + $0xb0] sm:$0xff]
      %v723 = vld [vmem:[%s699 + $0xb8] sm:$0x3f]
      %v724 = vld [vmem:[%s699 + $0xc0] sm:$0xff]
      %v725 = vld [vmem:[%s699 + $0xc8] sm:$0x3f]
      %v726 = vld [vmem:[%s699 + $0xd0] sm:$0xff]
      %v727 = vld [vmem:[%s699 + $0xd8] sm:$0x3f]
      %v728 = vld [vmem:[%s1 + $0x6] sm:$0x1]
      %v729 = vperm.slane %v728, 0
      %v730 = vmul.f32 %v700, %v729
      %v731 = vmul.f32 %v701, %v729
      %v732 = vmul.f32 %v702, %v729
      %v733 = vmul.f32 %v703, %v729
      %v734 = vmul.f32 %v704, %v729
      %v735 = vmul.f32 %v705, %v729
      %v736 = vmul.f32 %v706, %v729
      %v737 = vmul.f32 %v707, %v729
      %v738 = vmul.f32 %v708, %v729
      %v739 = vmul.f32 %v709, %v729
      %v740 = vmul.f32 %v710, %v729
      %v741 = vmul.f32 %v711, %v729
      %v742 = vmul.f32 %v712, %v729
      %v743 = vmul.f32 %v713, %v729
      %v744 = vmul.f32 %v714, %v729
      %v745 = vmul.f32 %v715, %v729
      %v746 = vmul.f32 %v716, %v729
      %v747 = vmul.f32 %v717, %v729
      %v748 = vmul.f32 %v718, %v729
      %v749 = vmul.f32 %v719, %v729
      %v750 = vmul.f32 %v720, %v729
      %v751 = vmul.f32 %v721, %v729
      %v752 = vmul.f32 %v722, %v729
      %v753 = vmul.f32 %v723, %v729
      %v754 = vmul.f32 %v724, %v729
      %v755 = vmul.f32 %v725, %v729
      %v756 = vmul.f32 %v726, %v729
      %v757 = vmul.f32 %v727, %v729
      %v758 = vadd.f32 %v671, %v730
      %v759 = vadd.f32 %v672, %v731
      %v760 = vadd.f32 %v673, %v732
      %v761 = vadd.f32 %v674, %v733
      %v762 = vadd.f32 %v675, %v734
      %v763 = vadd.f32 %v676, %v735
      %v764 = vadd.f32 %v677, %v736
      %v765 = vadd.f32 %v678, %v737
      %v766 = vadd.f32 %v679, %v738
      %v767 = vadd.f32 %v680, %v739
      %v768 = vadd.f32 %v681, %v740
      %v769 = vadd.f32 %v682, %v741
      %v770 = vadd.f32 %v683, %v742
      %v771 = vadd.f32 %v684, %v743
      %v772 = vadd.f32 %v685, %v744
      %v773 = vadd.f32 %v686, %v745
      %v774 = vadd.f32 %v687, %v746
      %v775 = vadd.f32 %v688, %v747
      %v776 = vadd.f32 %v689, %v748
      %v777 = vadd.f32 %v690, %v749
      %v778 = vadd.f32 %v691, %v750
      %v779 = vadd.f32 %v692, %v751
      %v780 = vadd.f32 %v693, %v752
      %v781 = vadd.f32 %v694, %v753
      %v782 = vadd.f32 %v695, %v754
      %v783 = vadd.f32 %v696, %v755
      %v784 = vadd.f32 %v697, %v756
      %v785 = vadd.f32 %v698, %v757
      %v786 = vld [vmem:[%s699 + $0x1] sm:$0xff]
      %v787 = vld [vmem:[%s699 + $0x9] sm:$0x3f]
      %v788 = vld [vmem:[%s699 + $0x11] sm:$0xff]
      %v789 = vld [vmem:[%s699 + $0x19] sm:$0x3f]
      %v790 = vld [vmem:[%s699 + $0x21] sm:$0xff]
      %v791 = vld [vmem:[%s699 + $0x29] sm:$0x3f]
      %v792 = vld [vmem:[%s699 + $0x31] sm:$0xff]
      %v793 = vld [vmem:[%s699 + $0x39] sm:$0x3f]
      %v794 = vld [vmem:[%s699 + $0x41] sm:$0xff]
      %v795 = vld [vmem:[%s699 + $0x49] sm:$0x3f]
      %v796 = vld [vmem:[%s699 + $0x51] sm:$0xff]
      %v797 = vld [vmem:[%s699 + $0x59] sm:$0x3f]
      %v798 = vld [vmem:[%s699 + $0x61] sm:$0xff]
      %v799 = vld [vmem:[%s699 + $0x69] sm:$0x3f]
      %v800 = vld [vmem:[%s699 + $0x71] sm:$0xff]
      %v801 = vld [vmem:[%s699 + $0x79] sm:$0x3f]
      %v802 = vld [vmem:[%s699 + $0x81] sm:$0xff]
      %v803 = vld [vmem:[%s699 + $0x89] sm:$0x3f]
      %v804 = vld [vmem:[%s699 + $0x91] sm:$0xff]
      %v805 = vld [vmem:[%s699 + $0x99] sm:$0x3f]
      %v806 = vld [vmem:[%s699 + $0xa1] sm:$0xff]
      %v807 = vld [vmem:[%s699 + $0xa9] sm:$0x3f]
      %v808 = vld [vmem:[%s699 + $0xb1] sm:$0xff]
      %v809 = vld [vmem:[%s699 + $0xb9] sm:$0x3f]
      %v810 = vld [vmem:[%s699 + $0xc1] sm:$0xff]
      %v811 = vld [vmem:[%s699 + $0xc9] sm:$0x3f]
      %v812 = vld [vmem:[%s699 + $0xd1] sm:$0xff]
      %v813 = vld [vmem:[%s699 + $0xd9] sm:$0x3f]
      %v814 = vld [vmem:[%s1 + $0x7] sm:$0x1]
      %v815 = vperm.slane %v814, 0
      %v816 = vmul.f32 %v786, %v815
      %v817 = vmul.f32 %v787, %v815
      %v818 = vmul.f32 %v788, %v815
      %v819 = vmul.f32 %v789, %v815
      %v820 = vmul.f32 %v790, %v815
      %v821 = vmul.f32 %v791, %v815
      %v822 = vmul.f32 %v792, %v815
      %v823 = vmul.f32 %v793, %v815
      %v824 = vmul.f32 %v794, %v815
      %v825 = vmul.f32 %v795, %v815
      %v826 = vmul.f32 %v796, %v815
      %v827 = vmul.f32 %v797, %v815
      %v828 = vmul.f32 %v798, %v815
      %v829 = vmul.f32 %v799, %v815
      %v830 = vmul.f32 %v800, %v815
      %v831 = vmul.f32 %v801, %v815
      %v832 = vmul.f32 %v802, %v815
      %v833 = vmul.f32 %v803, %v815
      %v834 = vmul.f32 %v804, %v815
      %v835 = vmul.f32 %v805, %v815
      %v836 = vmul.f32 %v806, %v815
      %v837 = vmul.f32 %v807, %v815
      %v838 = vmul.f32 %v808, %v815
      %v839 = vmul.f32 %v809, %v815
      %v840 = vmul.f32 %v810, %v815
      %v841 = vmul.f32 %v811, %v815
      %v842 = vmul.f32 %v812, %v815
      %v843 = vmul.f32 %v813, %v815
      %v844 = vadd.f32 %v758, %v816
      %v845 = vadd.f32 %v759, %v817
      %v846 = vadd.f32 %v760, %v818
      %v847 = vadd.f32 %v761, %v819
      %v848 = vadd.f32 %v762, %v820
      %v849 = vadd.f32 %v763, %v821
      %v850 = vadd.f32 %v764, %v822
      %v851 = vadd.f32 %v765, %v823
      %v852 = vadd.f32 %v766, %v824
      %v853 = vadd.f32 %v767, %v825
      %v854 = vadd.f32 %v768, %v826
      %v855 = vadd.f32 %v769, %v827
      %v856 = vadd.f32 %v770, %v828
      %v857 = vadd.f32 %v771, %v829
      %v858 = vadd.f32 %v772, %v830
      %v859 = vadd.f32 %v773, %v831
      %v860 = vadd.f32 %v774, %v832
      %v861 = vadd.f32 %v775, %v833
      %v862 = vadd.f32 %v776, %v834
      %v863 = vadd.f32 %v777, %v835
      %v864 = vadd.f32 %v778, %v836
      %v865 = vadd.f32 %v779, %v837
      %v866 = vadd.f32 %v780, %v838
      %v867 = vadd.f32 %v781, %v839
      %v868 = vadd.f32 %v782, %v840
      %v869 = vadd.f32 %v783, %v841
      %v870 = vadd.f32 %v784, %v842
      %v871 = vadd.f32 %v785, %v843
      %v872 = vld [vmem:[%s699 + $0x2] sm:$0xff]
      %v873 = vld [vmem:[%s699 + $0xa] sm:$0x3f]
      %v874 = vld [vmem:[%s699 + $0x12] sm:$0xff]
      %v875 = vld [vmem:[%s699 + $0x1a] sm:$0x3f]
      %v876 = vld [vmem:[%s699 + $0x22] sm:$0xff]
      %v877 = vld [vmem:[%s699 + $0x2a] sm:$0x3f]
      %v878 = vld [vmem:[%s699 + $0x32] sm:$0xff]
      %v879 = vld [vmem:[%s699 + $0x3a] sm:$0x3f]
      %v880 = vld [vmem:[%s699 + $0x42] sm:$0xff]
      %v881 = vld [vmem:[%s699 + $0x4a] sm:$0x3f]
      %v882 = vld [vmem:[%s699 + $0x52] sm:$0xff]
      %v883 = vld [vmem:[%s699 + $0x5a] sm:$0x3f]
      %v884 = vld [vmem:[%s699 + $0x62] sm:$0xff]
      %v885 = vld [vmem:[%s699 + $0x6a] sm:$0x3f]
      %v886 = vld [vmem:[%s699 + $0x72] sm:$0xff]
      %v887 = vld [vmem:[%s699 + $0x7a] sm:$0x3f]
      %v888 = vld [vmem:[%s699 + $0x82] sm:$0xff]
      %v889 = vld [vmem:[%s699 + $0x8a] sm:$0x3f]
      %v890 = vld [vmem:[%s699 + $0x92] sm:$0xff]
      %v891 = vld [vmem:[%s699 + $0x9a] sm:$0x3f]
      %v892 = vld [vmem:[%s699 + $0xa2] sm:$0xff]
      %v893 = vld [vmem:[%s699 + $0xaa] sm:$0x3f]
      %v894 = vld [vmem:[%s699 + $0xb2] sm:$0xff]
      %v895 = vld [vmem:[%s699 + $0xba] sm:$0x3f]
      %v896 = vld [vmem:[%s699 + $0xc2] sm:$0xff]
      %v897 = vld [vmem:[%s699 + $0xca] sm:$0x3f]
      %v898 = vld [vmem:[%s699 + $0xd2] sm:$0xff]
      %v899 = vld [vmem:[%s699 + $0xda] sm:$0x3f]
      %v900 = vld [vmem:[%s1 + $0x8] sm:$0x1]
      %v901 = vperm.slane %v900, 0
      %v902 = vmul.f32 %v872, %v901
      %v903 = vmul.f32 %v873, %v901
      %v904 = vmul.f32 %v874, %v901
      %v905 = vmul.f32 %v875, %v901
      %v906 = vmul.f32 %v876, %v901
      %v907 = vmul.f32 %v877, %v901
      %v908 = vmul.f32 %v878, %v901
      %v909 = vmul.f32 %v879, %v901
      %v910 = vmul.f32 %v880, %v901
      %v911 = vmul.f32 %v881, %v901
      %v912 = vmul.f32 %v882, %v901
      %v913 = vmul.f32 %v883, %v901
      %v914 = vmul.f32 %v884, %v901
      %v915 = vmul.f32 %v885, %v901
      %v916 = vmul.f32 %v886, %v901
      %v917 = vmul.f32 %v887, %v901
      %v918 = vmul.f32 %v888, %v901
      %v919 = vmul.f32 %v889, %v901
      %v920 = vmul.f32 %v890, %v901
      %v921 = vmul.f32 %v891, %v901
      %v922 = vmul.f32 %v892, %v901
      %v923 = vmul.f32 %v893, %v901
      %v924 = vmul.f32 %v894, %v901
      %v925 = vmul.f32 %v895, %v901
      %v926 = vmul.f32 %v896, %v901
      %v927 = vmul.f32 %v897, %v901
      %v928 = vmul.f32 %v898, %v901
      %v929 = vmul.f32 %v899, %v901
      %v930 = vadd.f32 %v844, %v902
      %v931 = vadd.f32 %v845, %v903
      %v932 = vadd.f32 %v846, %v904
      %v933 = vadd.f32 %v847, %v905
      %v934 = vadd.f32 %v848, %v906
      %v935 = vadd.f32 %v849, %v907
      %v936 = vadd.f32 %v850, %v908
      %v937 = vadd.f32 %v851, %v909
      %v938 = vadd.f32 %v852, %v910
      %v939 = vadd.f32 %v853, %v911
      %v940 = vadd.f32 %v854, %v912
      %v941 = vadd.f32 %v855, %v913
      %v942 = vadd.f32 %v856, %v914
      %v943 = vadd.f32 %v857, %v915
      %v944 = vadd.f32 %v858, %v916
      %v945 = vadd.f32 %v859, %v917
      %v946 = vadd.f32 %v860, %v918
      %v947 = vadd.f32 %v861, %v919
      %v948 = vadd.f32 %v862, %v920
      %v949 = vadd.f32 %v863, %v921
      %v950 = vadd.f32 %v864, %v922
      %v951 = vadd.f32 %v865, %v923
      %v952 = vadd.f32 %v866, %v924
      %v953 = vadd.f32 %v867, %v925
      %v954 = vadd.f32 %v868, %v926
      %v955 = vadd.f32 %v869, %v927
      %v956 = vadd.f32 %v870, %v928
      %v957 = vadd.f32 %v871, %v929
      %v958 = vpack.c.bf16 %v930, %v930
      %v959 = vpack.c.bf16 %v931, %v931
      %v960 = vpack.c.bf16 %v932, %v932
      %v961 = vpack.c.bf16 %v933, %v933
      %v962 = vpack.c.bf16 %v934, %v934
      %v963 = vpack.c.bf16 %v935, %v935
      %v964 = vpack.c.bf16 %v936, %v936
      %v965 = vpack.c.bf16 %v937, %v937
      %v966 = vpack.c.bf16 %v938, %v938
      %v967 = vpack.c.bf16 %v939, %v939
      %v968 = vpack.c.bf16 %v940, %v940
      %v969 = vpack.c.bf16 %v941, %v941
      %v970 = vpack.c.bf16 %v942, %v942
      %v971 = vpack.c.bf16 %v943, %v943
      %v972 = vpack.c.bf16 %v944, %v944
      %v973 = vpack.c.bf16 %v945, %v945
      %v974 = vpack.c.bf16 %v946, %v946
      %v975 = vpack.c.bf16 %v947, %v947
      %v976 = vpack.c.bf16 %v948, %v948
      %v977 = vpack.c.bf16 %v949, %v949
      %v978 = vpack.c.bf16 %v950, %v950
      %v979 = vpack.c.bf16 %v951, %v951
      %v980 = vpack.c.bf16 %v952, %v952
      %v981 = vpack.c.bf16 %v953, %v953
      %v982 = vpack.c.bf16 %v954, %v954
      %v983 = vpack.c.bf16 %v955, %v955
      %v984 = vpack.c.bf16 %v956, %v956
      %v985 = vpack.c.bf16 %v957, %v957
      %986 = vst [vmem:[%s177] sm:$0xf] %v958
      %987 = vst [vmem:[%s177 + $0x4] sm:$0x7] %v959
      %988 = vst [vmem:[%s177 + $0x8] sm:$0xf] %v960
      %989 = vst [vmem:[%s177 + $0xc] sm:$0x7] %v961
      %990 = vst [vmem:[%s177 + $0x10] sm:$0xf] %v962
      %991 = vst [vmem:[%s177 + $0x14] sm:$0x7] %v963
      %992 = vst [vmem:[%s177 + $0x18] sm:$0xf] %v964
      %993 = vst [vmem:[%s177 + $0x1c] sm:$0x7] %v965
      %994 = vst [vmem:[%s177 + $0x20] sm:$0xf] %v966
      %995 = vst [vmem:[%s177 + $0x24] sm:$0x7] %v967
      %996 = vst [vmem:[%s177 + $0x28] sm:$0xf] %v968
      %997 = vst [vmem:[%s177 + $0x2c] sm:$0x7] %v969
      %998 = vst [vmem:[%s177 + $0x30] sm:$0xf] %v970
      %999 = vst [vmem:[%s177 + $0x34] sm:$0x7] %v971
      %1000 = vst [vmem:[%s177 + $0x38] sm:$0xf] %v972
      %1001 = vst [vmem:[%s177 + $0x3c] sm:$0x7] %v973
      %1002 = vst [vmem:[%s177 + $0x40] sm:$0xf] %v974
      %1003 = vst [vmem:[%s177 + $0x44] sm:$0x7] %v975
      %1004 = vst [vmem:[%s177 + $0x48] sm:$0xf] %v976
      %1005 = vst [vmem:[%s177 + $0x4c] sm:$0x7] %v977
      %1006 = vst [vmem:[%s177 + $0x50] sm:$0xf] %v978
      %1007 = vst [vmem:[%s177 + $0x54] sm:$0x7] %v979
      %1008 = vst [vmem:[%s177 + $0x58] sm:$0xf] %v980
      %1009 = vst [vmem:[%s177 + $0x5c] sm:$0x7] %v981
      %1010 = vst [vmem:[%s177 + $0x60] sm:$0xf] %v982
      %1011 = vst [vmem:[%s177 + $0x64] sm:$0x7] %v983
      %1012 = vst [vmem:[%s177 + $0x68] sm:$0xf] %v984
      %1013 = vst [vmem:[%s177 + $0x6c] sm:$0x7] %v985
      %v1014 = vadd.f32 %v930, %v932
      %v1015 = vadd.f32 %v1014, %v934
      %v1016 = vadd.f32 %v1015, %v936
      %v1017 = vadd.f32 %v1016, %v938
      %v1018 = vadd.f32 %v1017, %v940
      %v1019 = vadd.f32 %v1018, %v942
      %v1020 = vadd.f32 %v1019, %v944
      %v1021 = vadd.f32 %v1020, %v946
      %v1022 = vadd.f32 %v1021, %v948
      %v1023 = vadd.f32 %v1022, %v950
      %v1024 = vadd.f32 %v1023, %v952
      %v1025 = vadd.f32 %v1024, %v954
      %v1026 = vadd.f32 %v1025, %v956
      %vm1027 = vcmask 1045504
      %v1028 = vsel %vm1027, %v931, 0.0
      %v1029 = vsel %vm1027, %v933, 0.0
      %v1030 = vadd.f32 %v1028, %v1029
      %v1031 = vsel %vm1027, %v935, 0.0
      %v1032 = vadd.f32 %v1030, %v1031
      %v1033 = vsel %vm1027, %v937, 0.0
      %v1034 = vadd.f32 %v1032, %v1033
      %v1035 = vsel %vm1027, %v939, 0.0
      %v1036 = vadd.f32 %v1034, %v1035
      %v1037 = vsel %vm1027, %v941, 0.0
      %v1038 = vadd.f32 %v1036, %v1037
      %v1039 = vsel %vm1027, %v943, 0.0
      %v1040 = vadd.f32 %v1038, %v1039
      %v1041 = vsel %vm1027, %v945, 0.0
      %v1042 = vadd.f32 %v1040, %v1041
      %v1043 = vsel %vm1027, %v947, 0.0
      %v1044 = vadd.f32 %v1042, %v1043
      %v1045 = vsel %vm1027, %v949, 0.0
      %v1046 = vadd.f32 %v1044, %v1045
      %v1047 = vsel %vm1027, %v951, 0.0
      %v1048 = vadd.f32 %v1046, %v1047
      %v1049 = vsel %vm1027, %v953, 0.0
      %v1050 = vadd.f32 %v1048, %v1049
      %v1051 = vsel %vm1027, %v955, 0.0
      %v1052 = vadd.f32 %v1050, %v1051
      %v1053 = vsel %vm1027, %v957, 0.0
      %v1054 = vadd.f32 %v1052, %v1053
      %v1055 = vsel %vm1027, %v1054, 0.0
      %v1056 = vadd.f32 %v1026, %v1055
      %v1057 = vrot.slane %v1056, 4
      %v1058 = vadd.f32 %v1056, %v1057
      %v1059 = vrot.slane %v1058, 2
      %v1060 = vadd.f32 %v1058, %v1059
      %v1061 = vrot.slane %v1060, 1
      %v1062 = vadd.f32 %v1060, %v1061
      %v1063 = vmul.f32 %v930, %v930
      %v1064 = vmul.f32 %v931, %v931
      %v1065 = vmul.f32 %v932, %v932
      %v1066 = vmul.f32 %v933, %v933
      %v1067 = vmul.f32 %v934, %v934
      %v1068 = vmul.f32 %v935, %v935
      %v1069 = vmul.f32 %v936, %v936
      %v1070 = vmul.f32 %v937, %v937
      %v1071 = vmul.f32 %v938, %v938
      %v1072 = vmul.f32 %v939, %v939
      %v1073 = vmul.f32 %v940, %v940
      %v1074 = vmul.f32 %v941, %v941
      %v1075 = vmul.f32 %v942, %v942
      %v1076 = vmul.f32 %v943, %v943
      %v1077 = vmul.f32 %v944, %v944
      %v1078 = vmul.f32 %v945, %v945
      %v1079 = vmul.f32 %v946, %v946
      %v1080 = vmul.f32 %v947, %v947
      %v1081 = vmul.f32 %v948, %v948
      %v1082 = vmul.f32 %v949, %v949
      %v1083 = vmul.f32 %v950, %v950
      %v1084 = vmul.f32 %v951, %v951
      %v1085 = vmul.f32 %v952, %v952
      %v1086 = vmul.f32 %v953, %v953
      %v1087 = vmul.f32 %v954, %v954
      %v1088 = vmul.f32 %v955, %v955
      %v1089 = vmul.f32 %v956, %v956
      %v1090 = vmul.f32 %v957, %v957
      %v1091 = vadd.f32 %v1063, %v1065
      %v1092 = vadd.f32 %v1091, %v1067
      %v1093 = vadd.f32 %v1092, %v1069
      %v1094 = vadd.f32 %v1093, %v1071
      %v1095 = vadd.f32 %v1094, %v1073
      %v1096 = vadd.f32 %v1095, %v1075
      %v1097 = vadd.f32 %v1096, %v1077
      %v1098 = vadd.f32 %v1097, %v1079
      %v1099 = vadd.f32 %v1098, %v1081
      %v1100 = vadd.f32 %v1099, %v1083
      %v1101 = vadd.f32 %v1100, %v1085
      %v1102 = vadd.f32 %v1101, %v1087
      %v1103 = vadd.f32 %v1102, %v1089
      %v1104 = vsel %vm1027, %v1064, 0.0
      %v1105 = vsel %vm1027, %v1066, 0.0
      %v1106 = vadd.f32 %v1104, %v1105
      %v1107 = vsel %vm1027, %v1068, 0.0
      %v1108 = vadd.f32 %v1106, %v1107
      %v1109 = vsel %vm1027, %v1070, 0.0
      %v1110 = vadd.f32 %v1108, %v1109
      %v1111 = vsel %vm1027, %v1072, 0.0
      %v1112 = vadd.f32 %v1110, %v1111
      %v1113 = vsel %vm1027, %v1074, 0.0
      %v1114 = vadd.f32 %v1112, %v1113
      %v1115 = vsel %vm1027, %v1076, 0.0
      %v1116 = vadd.f32 %v1114, %v1115
      %v1117 = vsel %vm1027, %v1078, 0.0
      %v1118 = vadd.f32 %v1116, %v1117
      %v1119 = vsel %vm1027, %v1080, 0.0
      %v1120 = vadd.f32 %v1118, %v1119
      %v1121 = vsel %vm1027, %v1082, 0.0
      %v1122 = vadd.f32 %v1120, %v1121
      %v1123 = vsel %vm1027, %v1084, 0.0
      %v1124 = vadd.f32 %v1122, %v1123
      %v1125 = vsel %vm1027, %v1086, 0.0
      %v1126 = vadd.f32 %v1124, %v1125
      %v1127 = vsel %vm1027, %v1088, 0.0
      %v1128 = vadd.f32 %v1126, %v1127
      %v1129 = vsel %vm1027, %v1090, 0.0
      %v1130 = vadd.f32 %v1128, %v1129
      %v1131 = vsel %vm1027, %v1130, 0.0
      %v1132 = vadd.f32 %v1103, %v1131
      %v1133 = vrot.slane %v1132, 4
      %v1134 = vadd.f32 %v1132, %v1133
      %v1135 = vrot.slane %v1134, 2
      %v1136 = vadd.f32 %v1134, %v1135
      %v1137 = vrot.slane %v1136, 1
      %v1138 = vadd.f32 %v1136, %v1137
      %1139 = vst [vmem:[%s181] sm:$0x1] %v1062
      %1140 = vst [vmem:[%s181 + $0x1] sm:$0x1] %v1138
      %p1141 = scmp.lt.s32.totalorder %s15, 1
      %s1142 = scalar_select %p1141, %s15, 1
      %s1143 = smul.addr %s1142, 28
      %s1144 = smul.addr %s1143, 4
      %s1145 = scalar_lea.vmem %s2, %s1144
      %p1146 = scmp.lt.s32.totalorder %s15, 1
      %s1147 = scalar_select %p1146, %s15, 1
      %s1148 = smul.addr %s1147, 2
      %s1149 = scalar_lea.vmem %s3, %s1148
      // Predicated region
      $region29: #{block_forward.2} parent=27 // pred_check
        %p1150 = pneg %p80
      $region30: #{block_forward.2} parent=27 // pred_check_branch
        %1152 = sbr.rel (%p1150) target = $region32
      $region31: #{block_forward.2} parent=27 // pred_region
        _
      $region32: #{block_forward.2} parent=27 // pred_fallthru
        _
      // Predicated region
      $region33: #{block_forward.2} parent=27 // pred_check
        %p1153 = pneg %p106
      $region34: #{block_forward.2} parent=27 // pred_check_branch
        %1155 = sbr.rel (%p1153) target = $region36
      $region35: #{block_forward.2} parent=27 // pred_region
        _
      $region36: #{block_forward.2} parent=27 // pred_fallthru
        _
    $region28: #{block_forward.2} parent=5 // pred_fallthru
      _
    %p1156 = scmp.le.s32.totalorder 2, %s10
    // Predicated region
    $region37: #{block_forward.2} parent=5 // pred_check
      %p1157 = pneg %p1156
    $region38: #{block_forward.2} parent=5 // pred_check_branch
      %1159 = sbr.rel (%p1157) target = $region40
    $region39: #{block_forward.2} parent=5 // pred_region
      %s1160 = ssub.s32 %s10, 2
      // Predicated region
      $region41: #{block_forward.2} parent=39 // pred_check
        %p1161 = pneg %p86
      $region42: #{block_forward.2} parent=39 // pred_check_branch
        %1163 = sbr.rel (%p1161) target = $region44
      $region43: #{block_forward.2} parent=39 // pred_region
        %p1164 = scmp.lt.s32.totalorder %s16, 1
        %s1165 = scalar_select %p1164, %s16, 1
        %s1166 = smul.addr %s1165, 28
        %s1167 = smul.addr %s1166, 4
        %s1168 = scalar_lea.vmem %s2, %s1167
      $region44: #{block_forward.2} parent=39 // pred_fallthru
        _
      // Predicated region
      $region45: #{block_forward.2} parent=39 // pred_check
        %p1169 = pneg %p112
      $region46: #{block_forward.2} parent=39 // pred_check_branch
        %1171 = sbr.rel (%p1169) target = $region48
      $region47: #{block_forward.2} parent=39 // pred_region
        %p1172 = scmp.lt.s32.totalorder %s16, 1
        %s1173 = scalar_select %p1172, %s16, 1
        %s1174 = smul.addr %s1173, 2
        %s1175 = scalar_lea.vmem %s3, %s1174
      $region48: #{block_forward.2} parent=39 // pred_fallthru
        _
    $region40: #{block_forward.2} parent=5 // pred_fallthru
      _
  $region6: #{block_forward.2} parent=0 // loop_footer
    %s14 = sadd.s32 1, %s10
  $region7: #{block_forward.2} parent=0 // loop_footer_branch
    %9 = sbr.rel target = $region3
  $region8: #{block_forward.2} parent=0 // loop_exit
    _

</llo_original>
